<compile_context>
chip_gen: v6e
topology: v6e:2x2x1
jax: 0.10.0
libtpu: 0.0.40
codegen_flags: <defaults>
</compile_context>

<pallas_src>
import functools

import jax
import jax.numpy as jnp
from jax.experimental import pallas as pl
from jax.experimental.pallas import tpu as pltpu

LN_EPS = 1e-5   # PyTorch nn.LayerNorm default
LANE = 128      # TPU lane width

PARAM_ORDER = ("g0", "b0", "w1", "b1", "g1", "bn1",
               "w2", "b2", "g2", "bn2", "w3", "b3")


def _round_up(n, m):
    return ((n + m - 1) // m) * m


def _layernorm(h, gamma, beta):
    # One-pass statistics (var = E[h^2] - mu^2, biased as in PyTorch), then a
    # single centered/scaled pass. rsqrt hits the EUP; one Newton step on the
    # (block, 1)-shaped column restores full f32 accuracy at negligible cost.
    mu = jnp.mean(h, axis=-1, keepdims=True)
    ms = jnp.mean(h * h, axis=-1, keepdims=True)
    var = jnp.maximum(ms - mu * mu, 0.0) + LN_EPS
    inv = jax.lax.rsqrt(var)
    inv = inv * (1.5 - 0.5 * var * inv * inv)
    return (h - mu) * inv * gamma + beta


def model1_kernel(
    x_ref,
    g0_ref, b0_ref,          # LayerNorm(input_dim)
    w1_ref, b1_ref,          # Linear(input_dim -> input_dim/2), W bf16
    g1_ref, bn1_ref,         # LayerNorm(input_dim/2)
    w2_ref, b2_ref,          # Linear(input_dim/2 -> input_dim/4), W bf16
    g2_ref, bn2_ref,         # LayerNorm(input_dim/4)
    w3_ref, b3_ref,          # Linear(input_dim/4 -> output_dim_padded), W bf16
    out_ref,
):
    x = x_ref[...].astype(jnp.float32)

    # norm_layer_in -> linear1
    h = _layernorm(x, g0_ref[...], b0_ref[...])
    h = jnp.dot(h.astype(jnp.bfloat16), w1_ref[...],
                preferred_element_type=jnp.float32) + b1_ref[...]

    # norm_layer1 -> ReLU (fused with bf16 cast) -> dropout2 (identity) -> linear2
    h = _layernorm(h, g1_ref[...], bn1_ref[...])
    h = jnp.dot(jnp.maximum(h, 0.0).astype(jnp.bfloat16), w2_ref[...],
                preferred_element_type=jnp.float32) + b2_ref[...]

    # norm_layer2 -> ReLU (fused with bf16 cast) -> output projection
    h = _layernorm(h, g2_ref[...], bn2_ref[...])
    out = jnp.dot(jnp.maximum(h, 0.0).astype(jnp.bfloat16), w3_ref[...],
                  preferred_element_type=jnp.float32) + b3_ref[...]

    out_ref[...] = out.astype(out_ref.dtype)


@functools.partial(jax.jit, static_argnames=("out_dim", "block_b"))
def model1_forward(x, params, out_dim, block_b=256):
    """x: (B, input_dim) float32. params: kernel-ready dict from init_params."""
    B, D = x.shape
    D1 = params["w1"].shape[1]
    D2 = params["w2"].shape[1]
    Dout_pad = params["w3"].shape[1]          # already lane-dense padded

    # Batch tile: clamp to the batch; Pallas masks the partial last tile.
    bb = max(8, min(block_b, _round_up(B, 8)))
    grid = (pl.cdiv(B, bb),)

    param_arrays = [params[k] for k in PARAM_ORDER]

    # Replicated (non-tiled) parameter spec: full block, always block (0, 0).
    # NOTE: these could be single-buffered (pl.Buffered(1)); at these sizes the
    # duplicated VMEM is negligible, so we keep the default for robustness.
    def rep_spec(arr):
        return pl.BlockSpec(arr.shape, lambda i: (0, 0))

    in_specs = [pl.BlockSpec((bb, D), lambda i: (i, 0))] + [
        rep_spec(a) for a in param_arrays
    ]
    out_spec = pl.BlockSpec((bb, Dout_pad), lambda i: (i, 0))

    # Advisory cost estimate for XLA's scheduler.
    flops = (2 * B * (D * D1 + D1 * D2 + D2 * Dout_pad)
             + 10 * B * (D + D1 + D2))
    bytes_accessed = (B * D * 4 + B * Dout_pad * 4
                      + sum(int(a.size) * a.dtype.itemsize for a in param_arrays))
    cost = pl.CostEstimate(flops=flops, transcendentals=3 * B,
                           bytes_accessed=bytes_accessed)

    out = pl.pallas_call(
        model1_kernel,
        out_shape=jax.ShapeDtypeStruct((B, Dout_pad), jnp.float32),
        grid_spec=pltpu.PrefetchScalarGridSpec(
            num_scalar_prefetch=0,
            grid=grid,
            in_specs=in_specs,
            out_specs=out_spec,
        ),
        compiler_params=pltpu.CompilerParams(
            dimension_semantics=("parallel",),   # megacore: shard batch tiles across TCs
        ),
        cost_estimate=cost,
    )(x, *param_arrays)

    # Only the column slice survives (lane-dense 128 -> true output_dim).
    return out[:, :out_dim]


def init_params(key, input_dim, output_dim):
    """Kernel-ready parameters matching Model1 shapes.

    Weights are stored pre-cast to bf16 and the output projection is pre-padded
    to a lane-dense width, so the per-call graph has no astype/pad ops.
    """
    d0 = int(input_dim)
    d1 = int(input_dim / 2)
    d2 = int(input_dim / 4)
    dout_pad = _round_up(max(output_dim, LANE), LANE)

    keys = jax.random.split(key, 6)

    def linear_init(kw, kb, fan_in, fan_out):
        # nn.Linear default: U(-1/sqrt(fan_in), 1/sqrt(fan_in)); stored as (in, out).
        bound = 1.0 / float(fan_in) ** 0.5
        w = jax.random.uniform(kw, (fan_in, fan_out), jnp.float32, -bound, bound)
        b = jax.random.uniform(kb, (1, fan_out), jnp.float32, -bound, bound)
        return w, b

    w1, b1 = linear_init(keys[0], keys[1], d0, d1)
    w2, b2 = linear_init(keys[2], keys[3], d1, d2)
    w3, b3 = linear_init(keys[4], keys[5], d2, output_dim)

    w3p = jnp.pad(w3, ((0, 0), (0, dout_pad - output_dim)))
    b3p = jnp.pad(b3, ((0, 0), (0, dout_pad - output_dim)))

    return {
        "g0": jnp.ones((1, d0), jnp.float32), "b0": jnp.zeros((1, d0), jnp.float32),
        "w1": w1.astype(jnp.bfloat16), "b1": b1,
        "g1": jnp.ones((1, d1), jnp.float32), "bn1": jnp.zeros((1, d1), jnp.float32),
        "w2": w2.astype(jnp.bfloat16), "b2": b2,
        "g2": jnp.ones((1, d2), jnp.float32), "bn2": jnp.zeros((1, d2), jnp.float32),
        "w3": w3p.astype(jnp.bfloat16), "b3": b3p,
    }


def _layernorm_ref(h, gamma, beta):
    mu = jnp.mean(h, axis=-1, keepdims=True)
    var = jnp.mean(jnp.square(h - mu), axis=-1, keepdims=True)
    return (h - mu) / jnp.sqrt(var + LN_EPS) * gamma + beta


def reference_forward(x, params, out_dim, *, bf16_matmuls=True):
    """Plain-JAX reference mirroring the PyTorch forward (eval mode)."""
    def mm(h, w, b):
        if bf16_matmuls:
            return jnp.dot(h.astype(jnp.bfloat16), w.astype(jnp.bfloat16),
                           preferred_element_type=jnp.float32) + b
        return jnp.dot(h, w.astype(jnp.float32),
                       preferred_element_type=jnp.float32,
                       precision=jax.lax.Precision.HIGHEST) + b

    h = _layernorm_ref(x.astype(jnp.float32), params["g0"], params["b0"])
    h = mm(h, params["w1"], params["b1"])
    h = jnp.maximum(_layernorm_ref(h, params["g1"], params["bn1"]), 0.0)
    h = mm(h, params["w2"], params["b2"])
    h = jnp.maximum(_layernorm_ref(h, params["g2"], params["bn2"]), 0.0)
    return mm(h, params["w3"], params["b3"])[:, :out_dim]


if __name__ == "__main__":
    INPUT_DIM = 256     # number of HVGs (small demo size; must be divisible by 4)
    OUTPUT_DIM = 100    # cell-type embedding dim (Model1 default)
    BATCH = 200         # not a multiple of the 128-row tile -> exercises masked partial tile

    root = jax.random.PRNGKey(0)
    kx, kp = jax.random.split(root)

    # log1p-normalized-counts-like, non-negative input
    x = jnp.log1p(jax.random.uniform(kx, (BATCH, INPUT_DIM), jnp.float32) * 10.0)
    params = init_params(kp, INPUT_DIM, OUTPUT_DIM)

    out = jax.block_until_ready(model1_forward(x, params, OUTPUT_DIM, block_b=128))

    assert out.shape == (BATCH, OUTPUT_DIM), out.shape
    assert bool(jnp.all(jnp.isfinite(out))), "non-finite output"

    # Check against a reference using the same bf16-operand matmuls (tolerance
    # covers accumulation-order / rounding-boundary differences).
    ref_bf16 = reference_forward(x, params, OUTPUT_DIM, bf16_matmuls=True)
    max_err = float(jnp.max(jnp.abs(out - ref_bf16)))
    assert jnp.allclose(out, ref_bf16, atol=2e-2, rtol=2e-2), (
        f"mismatch vs bf16 reference (max abs err {max_err:.3e})")

    # Loose sanity check against a true-f32 reference (bf16 operand rounding only).
    ref_f32 = reference_forward(x, params, OUTPUT_DIM, bf16_matmuls=False)
    assert jnp.allclose(out, ref_f32, atol=1e-1, rtol=1e-1), "mismatch vs f32 reference"

    print("KERNEL_OK")
</pallas_src>

<mosaic_0001>
module attributes {stable_mosaic.version = 11 : i64} {
  func.func @model1_kernel(%arg0: i32, %arg1: memref<128x256xf32, #tpu.memory_space<vmem>>, %arg2: memref<1x256xf32, #tpu.memory_space<vmem>>, %arg3: memref<1x256xf32, #tpu.memory_space<vmem>>, %arg4: memref<256x128xbf16, #tpu.memory_space<vmem>>, %arg5: memref<1x128xf32, #tpu.memory_space<vmem>>, %arg6: memref<1x128xf32, #tpu.memory_space<vmem>>, %arg7: memref<1x128xf32, #tpu.memory_space<vmem>>, %arg8: memref<128x64xbf16, #tpu.memory_space<vmem>>, %arg9: memref<1x64xf32, #tpu.memory_space<vmem>>, %arg10: memref<1x64xf32, #tpu.memory_space<vmem>>, %arg11: memref<1x64xf32, #tpu.memory_space<vmem>>, %arg12: memref<64x128xbf16, #tpu.memory_space<vmem>>, %arg13: memref<1x128xf32, #tpu.memory_space<vmem>>, %arg14: memref<128x128xf32, #tpu.memory_space<vmem>>) attributes {dimension_semantics = [#tpu.dimension_semantics<parallel>], iteration_bounds = array<i64: 2>, scalar_prefetch = 0 : i64, scratch_operands = 0 : i64, tpu.core_type = #tpu.core_type<tc>, window_params = [{transform_indices = @transform_0, window_bounds = array<i64: 128, 256>}, {pipeline_mode = #tpu.pipeline_mode<synchronous>, transform_indices = @transform_1, window_bounds = array<i64: 1, 256>}, {pipeline_mode = #tpu.pipeline_mode<synchronous>, transform_indices = @transform_2, window_bounds = array<i64: 1, 256>}, {pipeline_mode = #tpu.pipeline_mode<synchronous>, transform_indices = @transform_3, window_bounds = array<i64: 256, 128>}, {pipeline_mode = #tpu.pipeline_mode<synchronous>, transform_indices = @transform_4, window_bounds = array<i64: 1, 128>}, {pipeline_mode = #tpu.pipeline_mode<synchronous>, transform_indices = @transform_5, window_bounds = array<i64: 1, 128>}, {pipeline_mode = #tpu.pipeline_mode<synchronous>, transform_indices = @transform_6, window_bounds = array<i64: 1, 128>}, {pipeline_mode = #tpu.pipeline_mode<synchronous>, transform_indices = @transform_7, window_bounds = array<i64: 128, 64>}, {pipeline_mode = #tpu.pipeline_mode<synchronous>, transform_indices = @transform_8, window_bounds = array<i64: 1, 64>}, {pipeline_mode = #tpu.pipeline_mode<synchronous>, transform_indices = @transform_9, window_bounds = array<i64: 1, 64>}, {pipeline_mode = #tpu.pipeline_mode<synchronous>, transform_indices = @transform_10, window_bounds = array<i64: 1, 64>}, {pipeline_mode = #tpu.pipeline_mode<synchronous>, transform_indices = @transform_11, window_bounds = array<i64: 64, 128>}, {pipeline_mode = #tpu.pipeline_mode<synchronous>, transform_indices = @transform_12, window_bounds = array<i64: 1, 128>}, {transform_indices = @transform_13, window_bounds = array<i64: 128, 128>}]} {
    %c0 = arith.constant 0 : index
    %c0_0 = arith.constant 0 : index
    %0 = vector.load %arg1[%c0, %c0_0] : memref<128x256xf32, #tpu.memory_space<vmem>>, vector<128x256xf32>
    %c0_1 = arith.constant 0 : index
    %c0_2 = arith.constant 0 : index
    %1 = vector.load %arg2[%c0_1, %c0_2] : memref<1x256xf32, #tpu.memory_space<vmem>>, vector<1x256xf32>
    %c0_3 = arith.constant 0 : index
    %c0_4 = arith.constant 0 : index
    %2 = vector.load %arg3[%c0_3, %c0_4] : memref<1x256xf32, #tpu.memory_space<vmem>>, vector<1x256xf32>
    %cst = arith.constant dense<0.000000e+00> : vector<128xf32>
    %3 = vector.multi_reduction <add>, %0, %cst [1] : vector<128x256xf32> to vector<128xf32>
    %4 = vector.shape_cast %3 : vector<128xf32> to vector<128x1xf32>
    %cst_5 = arith.constant 2.560000e+02 : f32
    %5 = vector.broadcast %cst_5 : f32 to vector<128x1xf32>
    %6 = arith.divf %4, %5 : vector<128x1xf32>
    %7 = arith.mulf %0, %0 : vector<128x256xf32>
    %cst_6 = arith.constant dense<0.000000e+00> : vector<128xf32>
    %8 = vector.multi_reduction <add>, %7, %cst_6 [1] : vector<128x256xf32> to vector<128xf32>
    %9 = vector.shape_cast %8 : vector<128xf32> to vector<128x1xf32>
    %cst_7 = arith.constant 2.560000e+02 : f32
    %10 = vector.broadcast %cst_7 : f32 to vector<128x1xf32>
    %11 = arith.divf %9, %10 : vector<128x1xf32>
    %12 = arith.mulf %6, %6 : vector<128x1xf32>
    %13 = arith.subf %11, %12 : vector<128x1xf32>
    %cst_8 = arith.constant 0.000000e+00 : f32
    %14 = vector.broadcast %cst_8 : f32 to vector<128x1xf32>
    %15 = arith.maximumf %13, %14 : vector<128x1xf32>
    %cst_9 = arith.constant 9.99999974E-6 : f32
    %16 = vector.broadcast %cst_9 : f32 to vector<128x1xf32>
    %17 = arith.addf %15, %16 : vector<128x1xf32>
    %18 = math.rsqrt %17 : vector<128x1xf32>
    %cst_10 = arith.constant 5.000000e-01 : f32
    %19 = vector.broadcast %cst_10 : f32 to vector<128x1xf32>
    %20 = arith.mulf %19, %17 : vector<128x1xf32>
    %21 = arith.mulf %20, %18 : vector<128x1xf32>
    %22 = arith.mulf %21, %18 : vector<128x1xf32>
    %cst_11 = arith.constant 1.500000e+00 : f32
    %23 = vector.broadcast %cst_11 : f32 to vector<128x1xf32>
    %24 = arith.subf %23, %22 : vector<128x1xf32>
    %25 = arith.mulf %18, %24 : vector<128x1xf32>
    %26 = vector.broadcast %6 : vector<128x1xf32> to vector<128x256xf32>
    %27 = arith.subf %0, %26 : vector<128x256xf32>
    %28 = vector.broadcast %25 : vector<128x1xf32> to vector<128x256xf32>
    %29 = arith.mulf %27, %28 : vector<128x256xf32>
    %30 = vector.broadcast %1 : vector<1x256xf32> to vector<128x256xf32>
    %31 = arith.mulf %29, %30 : vector<128x256xf32>
    %32 = vector.broadcast %2 : vector<1x256xf32> to vector<128x256xf32>
    %33 = arith.addf %31, %32 : vector<128x256xf32>
    %34 = arith.truncf %33 : vector<128x256xf32> to vector<128x256xbf16>
    %c0_12 = arith.constant 0 : index
    %c0_13 = arith.constant 0 : index
    %35 = vector.load %arg4[%c0_12, %c0_13] : memref<256x128xbf16, #tpu.memory_space<vmem>>, vector<256x128xbf16>
    %cst_14 = arith.constant dense<0.000000e+00> : vector<128x128xf32>
    %36 = tpu.matmul %34, %35, %cst_14 {dimension_numbers = #tpu.dot_dimension_numbers<[1], [0], [0], [1], [0, 0, 1, 1], [], []>} : vector<128x256xbf16>, vector<256x128xbf16>, vector<128x128xf32> -> vector<128x128xf32>
    %c0_15 = arith.constant 0 : index
    %c0_16 = arith.constant 0 : index
    %37 = vector.load %arg5[%c0_15, %c0_16] : memref<1x128xf32, #tpu.memory_space<vmem>>, vector<1x128xf32>
    %38 = vector.broadcast %37 : vector<1x128xf32> to vector<128x128xf32>
    %39 = arith.addf %36, %38 : vector<128x128xf32>
    %c0_17 = arith.constant 0 : index
    %c0_18 = arith.constant 0 : index
    %40 = vector.load %arg6[%c0_17, %c0_18] : memref<1x128xf32, #tpu.memory_space<vmem>>, vector<1x128xf32>
    %c0_19 = arith.constant 0 : index
    %c0_20 = arith.constant 0 : index
    %41 = vector.load %arg7[%c0_19, %c0_20] : memref<1x128xf32, #tpu.memory_space<vmem>>, vector<1x128xf32>
    %cst_21 = arith.constant dense<0.000000e+00> : vector<128xf32>
    %42 = vector.multi_reduction <add>, %39, %cst_21 [1] : vector<128x128xf32> to vector<128xf32>
    %43 = vector.shape_cast %42 : vector<128xf32> to vector<128x1xf32>
    %cst_22 = arith.constant 1.280000e+02 : f32
    %44 = vector.broadcast %cst_22 : f32 to vector<128x1xf32>
    %45 = arith.divf %43, %44 : vector<128x1xf32>
    %46 = arith.mulf %39, %39 : vector<128x128xf32>
    %cst_23 = arith.constant dense<0.000000e+00> : vector<128xf32>
    %47 = vector.multi_reduction <add>, %46, %cst_23 [1] : vector<128x128xf32> to vector<128xf32>
    %48 = vector.shape_cast %47 : vector<128xf32> to vector<128x1xf32>
    %cst_24 = arith.constant 1.280000e+02 : f32
    %49 = vector.broadcast %cst_24 : f32 to vector<128x1xf32>
    %50 = arith.divf %48, %49 : vector<128x1xf32>
    %51 = arith.mulf %45, %45 : vector<128x1xf32>
    %52 = arith.subf %50, %51 : vector<128x1xf32>
    %cst_25 = arith.constant 0.000000e+00 : f32
    %53 = vector.broadcast %cst_25 : f32 to vector<128x1xf32>
    %54 = arith.maximumf %52, %53 : vector<128x1xf32>
    %cst_26 = arith.constant 9.99999974E-6 : f32
    %55 = vector.broadcast %cst_26 : f32 to vector<128x1xf32>
    %56 = arith.addf %54, %55 : vector<128x1xf32>
    %57 = math.rsqrt %56 : vector<128x1xf32>
    %cst_27 = arith.constant 5.000000e-01 : f32
    %58 = vector.broadcast %cst_27 : f32 to vector<128x1xf32>
    %59 = arith.mulf %58, %56 : vector<128x1xf32>
    %60 = arith.mulf %59, %57 : vector<128x1xf32>
    %61 = arith.mulf %60, %57 : vector<128x1xf32>
    %cst_28 = arith.constant 1.500000e+00 : f32
    %62 = vector.broadcast %cst_28 : f32 to vector<128x1xf32>
    %63 = arith.subf %62, %61 : vector<128x1xf32>
    %64 = arith.mulf %57, %63 : vector<128x1xf32>
    %65 = vector.broadcast %45 : vector<128x1xf32> to vector<128x128xf32>
    %66 = arith.subf %39, %65 : vector<128x128xf32>
    %67 = vector.broadcast %64 : vector<128x1xf32> to vector<128x128xf32>
    %68 = arith.mulf %66, %67 : vector<128x128xf32>
    %69 = vector.broadcast %40 : vector<1x128xf32> to vector<128x128xf32>
    %70 = arith.mulf %68, %69 : vector<128x128xf32>
    %71 = vector.broadcast %41 : vector<1x128xf32> to vector<128x128xf32>
    %72 = arith.addf %70, %71 : vector<128x128xf32>
    %cst_29 = arith.constant 0.000000e+00 : f32
    %73 = vector.broadcast %cst_29 : f32 to vector<128x128xf32>
    %74 = arith.maximumf %72, %73 : vector<128x128xf32>
    %75 = arith.truncf %74 : vector<128x128xf32> to vector<128x128xbf16>
    %c0_30 = arith.constant 0 : index
    %c0_31 = arith.constant 0 : index
    %76 = vector.load %arg8[%c0_30, %c0_31] : memref<128x64xbf16, #tpu.memory_space<vmem>>, vector<128x64xbf16>
    %cst_32 = arith.constant dense<0.000000e+00> : vector<128x64xf32>
    %77 = tpu.matmul %75, %76, %cst_32 {dimension_numbers = #tpu.dot_dimension_numbers<[1], [0], [0], [1], [0, 0, 1, 1], [], []>} : vector<128x128xbf16>, vector<128x64xbf16>, vector<128x64xf32> -> vector<128x64xf32>
    %c0_33 = arith.constant 0 : index
    %c0_34 = arith.constant 0 : index
    %78 = vector.load %arg9[%c0_33, %c0_34] : memref<1x64xf32, #tpu.memory_space<vmem>>, vector<1x64xf32>
    %79 = vector.broadcast %78 : vector<1x64xf32> to vector<128x64xf32>
    %80 = arith.addf %77, %79 : vector<128x64xf32>
    %c0_35 = arith.constant 0 : index
    %c0_36 = arith.constant 0 : index
    %81 = vector.load %arg10[%c0_35, %c0_36] : memref<1x64xf32, #tpu.memory_space<vmem>>, vector<1x64xf32>
    %c0_37 = arith.constant 0 : index
    %c0_38 = arith.constant 0 : index
    %82 = vector.load %arg11[%c0_37, %c0_38] : memref<1x64xf32, #tpu.memory_space<vmem>>, vector<1x64xf32>
    %cst_39 = arith.constant dense<0.000000e+00> : vector<128xf32>
    %83 = vector.multi_reduction <add>, %80, %cst_39 [1] : vector<128x64xf32> to vector<128xf32>
    %84 = vector.shape_cast %83 : vector<128xf32> to vector<128x1xf32>
    %cst_40 = arith.constant 6.400000e+01 : f32
    %85 = vector.broadcast %cst_40 : f32 to vector<128x1xf32>
    %86 = arith.divf %84, %85 : vector<128x1xf32>
    %87 = arith.mulf %80, %80 : vector<128x64xf32>
    %cst_41 = arith.constant dense<0.000000e+00> : vector<128xf32>
    %88 = vector.multi_reduction <add>, %87, %cst_41 [1] : vector<128x64xf32> to vector<128xf32>
    %89 = vector.shape_cast %88 : vector<128xf32> to vector<128x1xf32>
    %cst_42 = arith.constant 6.400000e+01 : f32
    %90 = vector.broadcast %cst_42 : f32 to vector<128x1xf32>
    %91 = arith.divf %89, %90 : vector<128x1xf32>
    %92 = arith.mulf %86, %86 : vector<128x1xf32>
    %93 = arith.subf %91, %92 : vector<128x1xf32>
    %cst_43 = arith.constant 0.000000e+00 : f32
    %94 = vector.broadcast %cst_43 : f32 to vector<128x1xf32>
    %95 = arith.maximumf %93, %94 : vector<128x1xf32>
    %cst_44 = arith.constant 9.99999974E-6 : f32
    %96 = vector.broadcast %cst_44 : f32 to vector<128x1xf32>
    %97 = arith.addf %95, %96 : vector<128x1xf32>
    %98 = math.rsqrt %97 : vector<128x1xf32>
    %cst_45 = arith.constant 5.000000e-01 : f32
    %99 = vector.broadcast %cst_45 : f32 to vector<128x1xf32>
    %100 = arith.mulf %99, %97 : vector<128x1xf32>
    %101 = arith.mulf %100, %98 : vector<128x1xf32>
    %102 = arith.mulf %101, %98 : vector<128x1xf32>
    %cst_46 = arith.constant 1.500000e+00 : f32
    %103 = vector.broadcast %cst_46 : f32 to vector<128x1xf32>
    %104 = arith.subf %103, %102 : vector<128x1xf32>
    %105 = arith.mulf %98, %104 : vector<128x1xf32>
    %106 = vector.broadcast %86 : vector<128x1xf32> to vector<128x64xf32>
    %107 = arith.subf %80, %106 : vector<128x64xf32>
    %108 = vector.broadcast %105 : vector<128x1xf32> to vector<128x64xf32>
    %109 = arith.mulf %107, %108 : vector<128x64xf32>
    %110 = vector.broadcast %81 : vector<1x64xf32> to vector<128x64xf32>
    %111 = arith.mulf %109, %110 : vector<128x64xf32>
    %112 = vector.broadcast %82 : vector<1x64xf32> to vector<128x64xf32>
    %113 = arith.addf %111, %112 : vector<128x64xf32>
    %cst_47 = arith.constant 0.000000e+00 : f32
    %114 = vector.broadcast %cst_47 : f32 to vector<128x64xf32>
    %115 = arith.maximumf %113, %114 : vector<128x64xf32>
    %116 = arith.truncf %115 : vector<128x64xf32> to vector<128x64xbf16>
    %c0_48 = arith.constant 0 : index
    %c0_49 = arith.constant 0 : index
    %117 = vector.load %arg12[%c0_48, %c0_49] : memref<64x128xbf16, #tpu.memory_space<vmem>>, vector<64x128xbf16>
    %cst_50 = arith.constant dense<0.000000e+00> : vector<128x128xf32>
    %118 = tpu.matmul %116, %117, %cst_50 {dimension_numbers = #tpu.dot_dimension_numbers<[1], [0], [0], [1], [0, 0, 1, 1], [], []>} : vector<128x64xbf16>, vector<64x128xbf16>, vector<128x128xf32> -> vector<128x128xf32>
    %c0_51 = arith.constant 0 : index
    %c0_52 = arith.constant 0 : index
    %119 = vector.load %arg13[%c0_51, %c0_52] : memref<1x128xf32, #tpu.memory_space<vmem>>, vector<1x128xf32>
    %120 = vector.broadcast %119 : vector<1x128xf32> to vector<128x128xf32>
    %121 = arith.addf %118, %120 : vector<128x128xf32>
    %c0_53 = arith.constant 0 : index
    %c0_54 = arith.constant 0 : index
    %122 = vector.load %arg14[%c0_53, %c0_54] : memref<128x128xf32, #tpu.memory_space<vmem>>, vector<128x128xf32>
    tpu.vector_store %arg14[%c0_53, %c0_54], %121 {strides = array<i32>} : memref<128x128xf32, #tpu.memory_space<vmem>>, vector<128x128xf32>,
    return
  }
  func.func @transform_0(%arg0: i32) -> (i32, i32) {
    %c0_i32 = arith.constant 0 : i32
    %c0_i32_0 = arith.constant 0 : i32
    return %arg0, %c0_i32 : i32, i32
  }
  func.func @transform_1(%arg0: i32) -> (i32, i32) {
    %c0_i32 = arith.constant 0 : i32
    %c0_i32_0 = arith.constant 0 : i32
    %c0_i32_1 = arith.constant 0 : i32
    return %c0_i32, %c0_i32_0 : i32, i32
  }
  func.func @transform_2(%arg0: i32) -> (i32, i32) {
    %c0_i32 = arith.constant 0 : i32
    %c0_i32_0 = arith.constant 0 : i32
    %c0_i32_1 = arith.constant 0 : i32
    return %c0_i32, %c0_i32_0 : i32, i32
  }
  func.func @transform_3(%arg0: i32) -> (i32, i32) {
    %c0_i32 = arith.constant 0 : i32
    %c0_i32_0 = arith.constant 0 : i32
    %c0_i32_1 = arith.constant 0 : i32
    return %c0_i32, %c0_i32_0 : i32, i32
  }
  func.func @transform_4(%arg0: i32) -> (i32, i32) {
    %c0_i32 = arith.constant 0 : i32
    %c0_i32_0 = arith.constant 0 : i32
    %c0_i32_1 = arith.constant 0 : i32
    return %c0_i32, %c0_i32_0 : i32, i32
  }
  func.func @transform_5(%arg0: i32) -> (i32, i32) {
    %c0_i32 = arith.constant 0 : i32
    %c0_i32_0 = arith.constant 0 : i32
    %c0_i32_1 = arith.constant 0 : i32
    return %c0_i32, %c0_i32_0 : i32, i32
  }
  func.func @transform_6(%arg0: i32) -> (i32, i32) {
    %c0_i32 = arith.constant 0 : i32
    %c0_i32_0 = arith.constant 0 : i32
    %c0_i32_1 = arith.constant 0 : i32
    return %c0_i32, %c0_i32_0 : i32, i32
  }
  func.func @transform_7(%arg0: i32) -> (i32, i32) {
    %c0_i32 = arith.constant 0 : i32
    %c0_i32_0 = arith.constant 0 : i32
    %c0_i32_1 = arith.constant 0 : i32
    return %c0_i32, %c0_i32_0 : i32, i32
  }
  func.func @transform_8(%arg0: i32) -> (i32, i32) {
    %c0_i32 = arith.constant 0 : i32
    %c0_i32_0 = arith.constant 0 : i32
    %c0_i32_1 = arith.constant 0 : i32
    return %c0_i32, %c0_i32_0 : i32, i32
  }
  func.func @transform_9(%arg0: i32) -> (i32, i32) {
    %c0_i32 = arith.constant 0 : i32
    %c0_i32_0 = arith.constant 0 : i32
    %c0_i32_1 = arith.constant 0 : i32
    return %c0_i32, %c0_i32_0 : i32, i32
  }
  func.func @transform_10(%arg0: i32) -> (i32, i32) {
    %c0_i32 = arith.constant 0 : i32
    %c0_i32_0 = arith.constant 0 : i32
    %c0_i32_1 = arith.constant 0 : i32
    return %c0_i32, %c0_i32_0 : i32, i32
  }
  func.func @transform_11(%arg0: i32) -> (i32, i32) {
    %c0_i32 = arith.constant 0 : i32
    %c0_i32_0 = arith.constant 0 : i32
    %c0_i32_1 = arith.constant 0 : i32
    return %c0_i32, %c0_i32_0 : i32, i32
  }
  func.func @transform_12(%arg0: i32) -> (i32, i32) {
    %c0_i32 = arith.constant 0 : i32
    %c0_i32_0 = arith.constant 0 : i32
    %c0_i32_1 = arith.constant 0 : i32
    return %c0_i32, %c0_i32_0 : i32, i32
  }
  func.func @transform_13(%arg0: i32) -> (i32, i32) {
    %c0_i32 = arith.constant 0 : i32
    %c0_i32_0 = arith.constant 0 : i32
    return %arg0, %c0_i32 : i32, i32
  }
}

</mosaic_0001>

<llo_original>
// kernel: model1_forward.1
$region0: #{model1_forward.1}
  #allocation0 [shape = 'u32[]', space=smem, size = 0x4, offset = 0x4, fixed_abs, tag = 'smem constant byte address 0x4 - core index']
  #allocation1 [shape = 'u32[144,128]{1,0:T(1,128)}', space=vmem, size = 0x12000, scoped, tag = 'internal scratch']
  %s0 = inlined_call_operand.hbm [shape: f32[200,256], index: 0, kind: input, shape index: {}]
  %s1 = inlined_call_operand.vmem [shape: f32[1,256], index: 1, kind: input, shape index: {}]
  %s2 = inlined_call_operand.vmem [shape: f32[1,256], index: 2, kind: input, shape index: {}]
  %s3 = inlined_call_operand.hbm [shape: bf16[256,128], index: 3, kind: input, shape index: {}]
  %s4 = inlined_call_operand.vmem [shape: f32[1,128], index: 4, kind: input, shape index: {}]
  %s5 = inlined_call_operand.vmem [shape: f32[1,128], index: 5, kind: input, shape index: {}]
  %s6 = inlined_call_operand.vmem [shape: f32[1,128], index: 6, kind: input, shape index: {}]
  %s7 = inlined_call_operand.vmem [shape: bf16[128,64], index: 7, kind: input, shape index: {}]
  %s8 = inlined_call_operand.vmem [shape: f32[1,64], index: 8, kind: input, shape index: {}]
  %s9 = inlined_call_operand.vmem [shape: f32[1,64], index: 9, kind: input, shape index: {}]
  %s10 = inlined_call_operand.vmem [shape: f32[1,64], index: 10, kind: input, shape index: {}]
  %s11 = inlined_call_operand.vmem [shape: bf16[64,128], index: 11, kind: input, shape index: {}]
  %s12 = inlined_call_operand.vmem [shape: f32[1,128], index: 12, kind: input, shape index: {}]
  %s13 = inlined_call_operand.hbm [shape: f32[200,128], index: 13, kind: output, shape index: {}]
  %s14 = sld [smem:[#allocation0]]
  $region93: #{model1_forward.1} parent=0
    _
  %s16 = ssub.s32 1, %s14
  %s17 = scalar_select 0, %s16, %s14
  $region1: #{model1_forward.1} parent=0
    #allocation2 [shape = 'u8[262144]{0}', space=vmem, size = 0x40000, scoped, tag = 'input window, operand 0']
    #allocation3 [shape = 's32[2]{0}', space=sflag, size = 0x8, scoped, tag = 'scoped memory for model1_forward.1']
    #allocation4 [shape = 's32[2]{0}', space=sflag, size = 0x8, scoped, tag = 'scoped memory for model1_forward.1']
    #allocation5 [shape = 'u8[65536]{0}', space=vmem, size = 0x10000, scoped, tag = 'input window, operand 3, single buffered']
    #allocation6 [shape = 's32[1]{0}', space=sflag, size = 0x4, scoped, tag = 'scoped memory for model1_forward.1']
    #allocation7 [shape = 'u8[131072]{0}', space=vmem, size = 0x20000, scoped, tag = 'output window, operand 0']
    %18 = vsyncpa [#allocation3], 0
    %s19 = scalar_lea.sflag [#allocation3], 1
    %20 = vsyncpa %s19, 0
    %21 = vsyncpa [#allocation6], 0
    %22 = vsyncpa [#allocation4], 0
    %s23 = scalar_lea.sflag [#allocation4], 1
    %24 = vsyncpa %s23, 0
    loop: start=0, step=1, limit=4
    $region2: #{model1_forward.1} parent=1 // loop_pre_header
      _
    $region3: #{model1_forward.1} parent=1 // loop_header
      %s26 = sphi 0, %s30
      %p27 = scmp.ge.s32.totalorder %s26, 4
      %s36 = sphi 0, %s38
      %s39 = sphi 0, %s36
      %s40 = sphi 0, %s39
      %s56 = sphi 0, %s40
      %s60 = sphi 0, %s60
      %s62 = sphi 0, %s60
      %s63 = sphi 0, %s62
      %s77 = sphi 0, %s63
      %s81 = sphi 0, %s81
      %s83 = sphi 0, %s81
      %s84 = sphi 0, %s83
      %s98 = sphi 0, %s84
      %s102 = sphi 0, %s102
      %s104 = sphi 0, %s102
      %s105 = sphi 0, %s104
      %s119 = sphi 0, %s105
      %s123 = sphi 0, %s123
      %s125 = sphi 0, %s123
      %s126 = sphi 0, %s125
      %s140 = sphi 0, %s126
      %s144 = sphi 0, %s144
      %s146 = sphi 0, %s144
      %s147 = sphi 0, %s146
      %s161 = sphi 0, %s147
      %s165 = sphi 0, %s165
      %s167 = sphi 0, %s165
      %s168 = sphi 0, %s167
      %s182 = sphi 0, %s168
      %s186 = sphi 0, %s186
      %s188 = sphi 0, %s186
      %s189 = sphi 0, %s188
      %s203 = sphi 0, %s189
      %s207 = sphi 0, %s207
      %s209 = sphi 0, %s207
      %s210 = sphi 0, %s209
      %s224 = sphi 0, %s210
      %s228 = sphi 0, %s228
      %s230 = sphi 0, %s228
      %s231 = sphi 0, %s230
      %s245 = sphi 0, %s231
      %s249 = sphi 0, %s249
      %s251 = sphi 0, %s249
      %s252 = sphi 0, %s251
      %s266 = sphi 0, %s252
      %s270 = sphi 0, %s270
      %s272 = sphi 0, %s270
      %s273 = sphi 0, %s272
      %s287 = sphi 0, %s273
      %s291 = sphi 0, %s291
      %s293 = sphi 0, %s291
      %s294 = sphi 0, %s293
      %s308 = sphi 0, %s294
      %s314 = sphi 0, %s316
      %s317 = sphi 0, %s314
      %s318 = sphi 0, %s317
      %s334 = sphi 0, %s318
    $region4: #{model1_forward.1} parent=1 // loop_header_branch
      %29 = sbr.rel (%p27) target = $region8
    $region5: #{model1_forward.1} parent=1 // loop_body
      %s31 = ssub.s32 %s26, 1
      %s32 = ssub.s32 %s26, 2
      %s33 = sadd.s32 %s26, 1
      %s34 = ssub.s32 %s26, %s33
      %p35 = scmp.eq.s32.totalorder %s34, 0
      %s37 = sadd.s32 %s36, 1
      %s38 = scalar_select %p35, %s36, %s37
      %p41 = pneg %p35
      %p42 = scmp.eq.s32.totalorder %s26, 1
      %p43 = por %p41, %p42
      %p44 = scmp.ne.s32.totalorder %s36, %s39
      %p45 = scmp.eq.s32.totalorder %s26, 0
      %p46 = por %p44, %p45
      %p47 = scmp.ne.s32.totalorder %s36, %s39
      %p48 = scmp.eq.s32.totalorder %s31, 1
      %p49 = por %p47, %p48
      %p50 = scmp.ne.s32.totalorder %s39, %s40
      %p51 = scmp.eq.s32.totalorder %s31, 0
      %p52 = por %p50, %p51
      %p53 = scmp.ne.s32.totalorder %s39, %s40
      %p54 = scmp.eq.s32.totalorder %s32, 1
      %p55 = por %p53, %p54
      %p57 = scmp.ne.s32.totalorder %s40, %s56
      %p58 = scmp.eq.s32.totalorder %s32, 0
      %p59 = por %p57, %p58
      %s61 = sadd.s32 %s60, 1
      %p64 = scmp.eq.s32.totalorder %s26, 1
      %p65 = scmp.ne.s32.totalorder %s60, %s62
      %p66 = scmp.eq.s32.totalorder %s26, 0
      %p67 = por %p65, %p66
      %p68 = scmp.ne.s32.totalorder %s60, %s62
      %p69 = scmp.eq.s32.totalorder %s31, 1
      %p70 = por %p68, %p69
      %p71 = scmp.ne.s32.totalorder %s62, %s63
      %p72 = scmp.eq.s32.totalorder %s31, 0
      %p73 = por %p71, %p72
      %p74 = scmp.ne.s32.totalorder %s62, %s63
      %p75 = scmp.eq.s32.totalorder %s32, 1
      %p76 = por %p74, %p75
      %p78 = scmp.ne.s32.totalorder %s63, %s77
      %p79 = scmp.eq.s32.totalorder %s32, 0
      %p80 = por %p78, %p79
      %s82 = sadd.s32 %s81, 1
      %p85 = scmp.eq.s32.totalorder %s26, 1
      %p86 = scmp.ne.s32.totalorder %s81, %s83
      %p87 = scmp.eq.s32.totalorder %s26, 0
      %p88 = por %p86, %p87
      %p89 = scmp.ne.s32.totalorder %s81, %s83
      %p90 = scmp.eq.s32.totalorder %s31, 1
      %p91 = por %p89, %p90
      %p92 = scmp.ne.s32.totalorder %s83, %s84
      %p93 = scmp.eq.s32.totalorder %s31, 0
      %p94 = por %p92, %p93
      %p95 = scmp.ne.s32.totalorder %s83, %s84
      %p96 = scmp.eq.s32.totalorder %s32, 1
      %p97 = por %p95, %p96
      %p99 = scmp.ne.s32.totalorder %s84, %s98
      %p100 = scmp.eq.s32.totalorder %s32, 0
      %p101 = por %p99, %p100
      %s103 = sadd.s32 %s102, 1
      %p106 = scmp.eq.s32.totalorder %s26, 1
      %p107 = scmp.ne.s32.totalorder %s102, %s104
      %p108 = scmp.eq.s32.totalorder %s26, 0
      %p109 = por %p107, %p108
      %p110 = scmp.ne.s32.totalorder %s102, %s104
      %p111 = scmp.eq.s32.totalorder %s31, 1
      %p112 = por %p110, %p111
      %p113 = scmp.ne.s32.totalorder %s104, %s105
      %p114 = scmp.eq.s32.totalorder %s31, 0
      %p115 = por %p113, %p114
      %p116 = scmp.ne.s32.totalorder %s104, %s105
      %p117 = scmp.eq.s32.totalorder %s32, 1
      %p118 = por %p116, %p117
      %p120 = scmp.ne.s32.totalorder %s105, %s119
      %p121 = scmp.eq.s32.totalorder %s32, 0
      %p122 = por %p120, %p121
      %s124 = sadd.s32 %s123, 1
      %p127 = scmp.eq.s32.totalorder %s26, 1
      %p128 = scmp.ne.s32.totalorder %s123, %s125
      %p129 = scmp.eq.s32.totalorder %s26, 0
      %p130 = por %p128, %p129
      %p131 = scmp.ne.s32.totalorder %s123, %s125
      %p132 = scmp.eq.s32.totalorder %s31, 1
      %p133 = por %p131, %p132
      %p134 = scmp.ne.s32.totalorder %s125, %s126
      %p135 = scmp.eq.s32.totalorder %s31, 0
      %p136 = por %p134, %p135
      %p137 = scmp.ne.s32.totalorder %s125, %s126
      %p138 = scmp.eq.s32.totalorder %s32, 1
      %p139 = por %p137, %p138
      %p141 = scmp.ne.s32.totalorder %s126, %s140
      %p142 = scmp.eq.s32.totalorder %s32, 0
      %p143 = por %p141, %p142
      %s145 = sadd.s32 %s144, 1
      %p148 = scmp.eq.s32.totalorder %s26, 1
      %p149 = scmp.ne.s32.totalorder %s144, %s146
      %p150 = scmp.eq.s32.totalorder %s26, 0
      %p151 = por %p149, %p150
      %p152 = scmp.ne.s32.totalorder %s144, %s146
      %p153 = scmp.eq.s32.totalorder %s31, 1
      %p154 = por %p152, %p153
      %p155 = scmp.ne.s32.totalorder %s146, %s147
      %p156 = scmp.eq.s32.totalorder %s31, 0
      %p157 = por %p155, %p156
      %p158 = scmp.ne.s32.totalorder %s146, %s147
      %p159 = scmp.eq.s32.totalorder %s32, 1
      %p160 = por %p158, %p159
      %p162 = scmp.ne.s32.totalorder %s147, %s161
      %p163 = scmp.eq.s32.totalorder %s32, 0
      %p164 = por %p162, %p163
      %s166 = sadd.s32 %s165, 1
      %p169 = scmp.eq.s32.totalorder %s26, 1
      %p170 = scmp.ne.s32.totalorder %s165, %s167
      %p171 = scmp.eq.s32.totalorder %s26, 0
      %p172 = por %p170, %p171
      %p173 = scmp.ne.s32.totalorder %s165, %s167
      %p174 = scmp.eq.s32.totalorder %s31, 1
      %p175 = por %p173, %p174
      %p176 = scmp.ne.s32.totalorder %s167, %s168
      %p177 = scmp.eq.s32.totalorder %s31, 0
      %p178 = por %p176, %p177
      %p179 = scmp.ne.s32.totalorder %s167, %s168
      %p180 = scmp.eq.s32.totalorder %s32, 1
      %p181 = por %p179, %p180
      %p183 = scmp.ne.s32.totalorder %s168, %s182
      %p184 = scmp.eq.s32.totalorder %s32, 0
      %p185 = por %p183, %p184
      %s187 = sadd.s32 %s186, 1
      %p190 = scmp.eq.s32.totalorder %s26, 1
      %p191 = scmp.ne.s32.totalorder %s186, %s188
      %p192 = scmp.eq.s32.totalorder %s26, 0
      %p193 = por %p191, %p192
      %p194 = scmp.ne.s32.totalorder %s186, %s188
      %p195 = scmp.eq.s32.totalorder %s31, 1
      %p196 = por %p194, %p195
      %p197 = scmp.ne.s32.totalorder %s188, %s189
      %p198 = scmp.eq.s32.totalorder %s31, 0
      %p199 = por %p197, %p198
      %p200 = scmp.ne.s32.totalorder %s188, %s189
      %p201 = scmp.eq.s32.totalorder %s32, 1
      %p202 = por %p200, %p201
      %p204 = scmp.ne.s32.totalorder %s189, %s203
      %p205 = scmp.eq.s32.totalorder %s32, 0
      %p206 = por %p204, %p205
      %s208 = sadd.s32 %s207, 1
      %p211 = scmp.eq.s32.totalorder %s26, 1
      %p212 = scmp.ne.s32.totalorder %s207, %s209
      %p213 = scmp.eq.s32.totalorder %s26, 0
      %p214 = por %p212, %p213
      %p215 = scmp.ne.s32.totalorder %s207, %s209
      %p216 = scmp.eq.s32.totalorder %s31, 1
      %p217 = por %p215, %p216
      %p218 = scmp.ne.s32.totalorder %s209, %s210
      %p219 = scmp.eq.s32.totalorder %s31, 0
      %p220 = por %p218, %p219
      %p221 = scmp.ne.s32.totalorder %s209, %s210
      %p222 = scmp.eq.s32.totalorder %s32, 1
      %p223 = por %p221, %p222
      %p225 = scmp.ne.s32.totalorder %s210, %s224
      %p226 = scmp.eq.s32.totalorder %s32, 0
      %p227 = por %p225, %p226
      %s229 = sadd.s32 %s228, 1
      %p232 = scmp.eq.s32.totalorder %s26, 1
      %p233 = scmp.ne.s32.totalorder %s228, %s230
      %p234 = scmp.eq.s32.totalorder %s26, 0
      %p235 = por %p233, %p234
      %p236 = scmp.ne.s32.totalorder %s228, %s230
      %p237 = scmp.eq.s32.totalorder %s31, 1
      %p238 = por %p236, %p237
      %p239 = scmp.ne.s32.totalorder %s230, %s231
      %p240 = scmp.eq.s32.totalorder %s31, 0
      %p241 = por %p239, %p240
      %p242 = scmp.ne.s32.totalorder %s230, %s231
      %p243 = scmp.eq.s32.totalorder %s32, 1
      %p244 = por %p242, %p243
      %p246 = scmp.ne.s32.totalorder %s231, %s245
      %p247 = scmp.eq.s32.totalorder %s32, 0
      %p248 = por %p246, %p247
      %s250 = sadd.s32 %s249, 1
      %p253 = scmp.eq.s32.totalorder %s26, 1
      %p254 = scmp.ne.s32.totalorder %s249, %s251
      %p255 = scmp.eq.s32.totalorder %s26, 0
      %p256 = por %p254, %p255
      %p257 = scmp.ne.s32.totalorder %s249, %s251
      %p258 = scmp.eq.s32.totalorder %s31, 1
      %p259 = por %p257, %p258
      %p260 = scmp.ne.s32.totalorder %s251, %s252
      %p261 = scmp.eq.s32.totalorder %s31, 0
      %p262 = por %p260, %p261
      %p263 = scmp.ne.s32.totalorder %s251, %s252
      %p264 = scmp.eq.s32.totalorder %s32, 1
      %p265 = por %p263, %p264
      %p267 = scmp.ne.s32.totalorder %s252, %s266
      %p268 = scmp.eq.s32.totalorder %s32, 0
      %p269 = por %p267, %p268
      %s271 = sadd.s32 %s270, 1
      %p274 = scmp.eq.s32.totalorder %s26, 1
      %p275 = scmp.ne.s32.totalorder %s270, %s272
      %p276 = scmp.eq.s32.totalorder %s26, 0
      %p277 = por %p275, %p276
      %p278 = scmp.ne.s32.totalorder %s270, %s272
      %p279 = scmp.eq.s32.totalorder %s31, 1
      %p280 = por %p278, %p279
      %p281 = scmp.ne.s32.totalorder %s272, %s273
      %p282 = scmp.eq.s32.totalorder %s31, 0
      %p283 = por %p281, %p282
      %p284 = scmp.ne.s32.totalorder %s272, %s273
      %p285 = scmp.eq.s32.totalorder %s32, 1
      %p286 = por %p284, %p285
      %p288 = scmp.ne.s32.totalorder %s273, %s287
      %p289 = scmp.eq.s32.totalorder %s32, 0
      %p290 = por %p288, %p289
      %s292 = sadd.s32 %s291, 1
      %p295 = scmp.eq.s32.totalorder %s26, 1
      %p296 = scmp.ne.s32.totalorder %s291, %s293
      %p297 = scmp.eq.s32.totalorder %s26, 0
      %p298 = por %p296, %p297
      %p299 = scmp.ne.s32.totalorder %s291, %s293
      %p300 = scmp.eq.s32.totalorder %s31, 1
      %p301 = por %p299, %p300
      %p302 = scmp.ne.s32.totalorder %s293, %s294
      %p303 = scmp.eq.s32.totalorder %s31, 0
      %p304 = por %p302, %p303
      %p305 = scmp.ne.s32.totalorder %s293, %s294
      %p306 = scmp.eq.s32.totalorder %s32, 1
      %p307 = por %p305, %p306
      %p309 = scmp.ne.s32.totalorder %s294, %s308
      %p310 = scmp.eq.s32.totalorder %s32, 0
      %p311 = por %p309, %p310
      %s312 = ssub.s32 %s26, %s33
      %p313 = scmp.eq.s32.totalorder %s312, 0
      %s315 = sadd.s32 %s314, 1
      %s316 = scalar_select %p313, %s314, %s315
      %p319 = pneg %p313
      %p320 = scmp.eq.s32.totalorder %s26, 1
      %p321 = por %p319, %p320
      %p322 = scmp.ne.s32.totalorder %s314, %s317
      %p323 = scmp.eq.s32.totalorder %s26, 0
      %p324 = por %p322, %p323
      %p325 = scmp.ne.s32.totalorder %s314, %s317
      %p326 = scmp.eq.s32.totalorder %s31, 1
      %p327 = por %p325, %p326
      %p328 = scmp.ne.s32.totalorder %s317, %s318
      %p329 = scmp.eq.s32.totalorder %s31, 0
      %p330 = por %p328, %p329
      %p331 = scmp.ne.s32.totalorder %s317, %s318
      %p332 = scmp.eq.s32.totalorder %s32, 1
      %p333 = por %p331, %p332
      %p335 = scmp.ne.s32.totalorder %s318, %s334
      %p336 = scmp.eq.s32.totalorder %s32, 0
      %p337 = por %p335, %p336
      %p338 = scmp.le.s32.totalorder 1, %s26
      %p339 = scmp.lt.s32.totalorder %s26, 3
      %p340 = pnand %p338, %p339
      %p341 = pneg %p340
      // Predicated region
      $region9: #{model1_forward.1} parent=5 // pred_check
        _
      $region10: #{model1_forward.1} parent=5 // pred_check_branch
        %343 = sbr.rel (%p340) target = $region12
      $region11: #{model1_forward.1} parent=5 // pred_region
        %s344 = ssub.s32 %s26, 1
        // Predicated region
        $region13: #{model1_forward.1} parent=11 // pred_check
          %p345 = pneg %p73
        $region14: #{model1_forward.1} parent=11 // pred_check_branch
          %347 = sbr.rel (%p345) target = $region16
        $region15: #{model1_forward.1} parent=11 // pred_region
          _
        $region16: #{model1_forward.1} parent=11 // pred_fallthru
          _
        // Predicated region
        $region17: #{model1_forward.1} parent=11 // pred_check
          %p348 = pneg %p94
        $region18: #{model1_forward.1} parent=11 // pred_check_branch
          %350 = sbr.rel (%p348) target = $region20
        $region19: #{model1_forward.1} parent=11 // pred_region
          _
        $region20: #{model1_forward.1} parent=11 // pred_fallthru
          _
        // Predicated region
        $region21: #{model1_forward.1} parent=11 // pred_check
          %p351 = pneg %p115
        $region22: #{model1_forward.1} parent=11 // pred_check_branch
          %353 = sbr.rel (%p351) target = $region24
        $region23: #{model1_forward.1} parent=11 // pred_region
          %s355 = ssub.s32 2048, 2048
          %356 = vsyncadd [#allocation6], %s355
          %s357 = sshll.u32 [#allocation5], 4
          %s358 = int_to_ptr.vmem [resolvable:$true] %s357
          %363 = dma.hbm_to_vmem [thread:$0]  %s3, 2048, %s358, [#allocation6], 64, 64, 4
        $region24: #{model1_forward.1} parent=11 // pred_fallthru
          _
        // Predicated region
        $region25: #{model1_forward.1} parent=11 // pred_check
          %p364 = pneg %p136
        $region26: #{model1_forward.1} parent=11 // pred_check_branch
          %366 = sbr.rel (%p364) target = $region28
        $region27: #{model1_forward.1} parent=11 // pred_region
          _
        $region28: #{model1_forward.1} parent=11 // pred_fallthru
          _
        // Predicated region
        $region29: #{model1_forward.1} parent=11 // pred_check
          %p367 = pneg %p157
        $region30: #{model1_forward.1} parent=11 // pred_check_branch
          %369 = sbr.rel (%p367) target = $region32
        $region31: #{model1_forward.1} parent=11 // pred_region
          _
        $region32: #{model1_forward.1} parent=11 // pred_fallthru
          _
        // Predicated region
        $region33: #{model1_forward.1} parent=11 // pred_check
          %p370 = pneg %p178
        $region34: #{model1_forward.1} parent=11 // pred_check_branch
          %372 = sbr.rel (%p370) target = $region36
        $region35: #{model1_forward.1} parent=11 // pred_region
          _
        $region36: #{model1_forward.1} parent=11 // pred_fallthru
          _
        // Predicated region
        $region37: #{model1_forward.1} parent=11 // pred_check
          %p373 = pneg %p199
        $region38: #{model1_forward.1} parent=11 // pred_check_branch
          %375 = sbr.rel (%p373) target = $region40
        $region39: #{model1_forward.1} parent=11 // pred_region
          _
        $region40: #{model1_forward.1} parent=11 // pred_fallthru
          _
        // Predicated region
        $region41: #{model1_forward.1} parent=11 // pred_check
          %p376 = pneg %p220
        $region42: #{model1_forward.1} parent=11 // pred_check_branch
          %378 = sbr.rel (%p376) target = $region44
        $region43: #{model1_forward.1} parent=11 // pred_region
          _
        $region44: #{model1_forward.1} parent=11 // pred_fallthru
          _
        // Predicated region
        $region45: #{model1_forward.1} parent=11 // pred_check
          %p379 = pneg %p241
        $region46: #{model1_forward.1} parent=11 // pred_check_branch
          %381 = sbr.rel (%p379) target = $region48
        $region47: #{model1_forward.1} parent=11 // pred_region
          _
        $region48: #{model1_forward.1} parent=11 // pred_fallthru
          _
        // Predicated region
        $region49: #{model1_forward.1} parent=11 // pred_check
          %p382 = pneg %p262
        $region50: #{model1_forward.1} parent=11 // pred_check_branch
          %384 = sbr.rel (%p382) target = $region52
        $region51: #{model1_forward.1} parent=11 // pred_region
          _
        $region52: #{model1_forward.1} parent=11 // pred_fallthru
          _
        // Predicated region
        $region53: #{model1_forward.1} parent=11 // pred_check
          %p385 = pneg %p283
        $region54: #{model1_forward.1} parent=11 // pred_check_branch
          %387 = sbr.rel (%p385) target = $region56
        $region55: #{model1_forward.1} parent=11 // pred_region
          _
        $region56: #{model1_forward.1} parent=11 // pred_fallthru
          _
        // Predicated region
        $region57: #{model1_forward.1} parent=11 // pred_check
          %p388 = pneg %p304
        $region58: #{model1_forward.1} parent=11 // pred_check_branch
          %390 = sbr.rel (%p388) target = $region60
        $region59: #{model1_forward.1} parent=11 // pred_region
          _
        $region60: #{model1_forward.1} parent=11 // pred_fallthru
          _
      $region12: #{model1_forward.1} parent=5 // pred_fallthru
        _
      %p391 = scmp.lt.s32.totalorder %s26, 2
      // Predicated region
      $region61: #{model1_forward.1} parent=5 // pred_check
        %p392 = pneg %p391
      $region62: #{model1_forward.1} parent=5 // pred_check_branch
        %394 = sbr.rel (%p392) target = $region64
      $region63: #{model1_forward.1} parent=5 // pred_region
        // Predicated region
        $region65: #{model1_forward.1} parent=63 // pred_check
          %p395 = pneg %p46
        $region66: #{model1_forward.1} parent=63 // pred_check_branch
          %397 = sbr.rel (%p395) target = $region68
        $region67: #{model1_forward.1} parent=63 // pred_region
          %s398 = sand.u32 %s36, 1
          %s399 = scalar_lea.sflag [#allocation3], %s398
          %s400 = sand.u32 %s36, 1
          %s401 = smul.addr %s400, 256
          %s402 = scalar_lea.vmem [#allocation2], %s401
          %s403 = smul.u32 16, %s26
          %s404 = ssub.s32 25, %s403
          %p405 = scmp.lt.s32.totalorder %s404, 16
          %s406 = scalar_select %p405, %s404, 16
          %s407 = smul.u32 128, %s406
          %s408 = smul.u32 %s407, 2
          %s410 = ssub.s32 4096, %s408
          %411 = vsyncadd %s399, %s410
          %p412 = scmp.ne.s32.totalorder 0, %s408
          %s413 = smul.addr %s403, 2
          %s414 = smul.addr %s413, 128
          %s415 = scalar_lea.hbm %s0, %s414
          %s416 = smul.u32 16, %s406
          %s417 = sshll.u32 %s402, 4
          %s418 = int_to_ptr.vmem [resolvable:$true] %s417
          %s419 = sshll.u32 %s416, 4
          %423 = dma.hbm_to_vmem [thread:$0]  (%p412), %s415, %s419, %s418, %s399, 256, 256, 16
        $region68: #{model1_forward.1} parent=63 // pred_fallthru
          _
      $region64: #{model1_forward.1} parent=5 // pred_fallthru
        _
      %p424 = scmp.le.s32.totalorder 1, %s26
      %p425 = scmp.lt.s32.totalorder %s26, 3
      %p426 = pnand %p424, %p425
      %p427 = pneg %p426
      // Predicated region
      $region69: #{model1_forward.1} parent=5 // pred_check
        _
      $region70: #{model1_forward.1} parent=5 // pred_check_branch
        %429 = sbr.rel (%p426) target = $region72
      $region71: #{model1_forward.1} parent=5 // pred_region
        %s430 = ssub.s32 %s26, 1
        %s431 = sand.u32 %s39, 1
        %s432 = scalar_lea.sflag [#allocation3], %s431
        %s433 = sand.u32 %s39, 1
        %s434 = smul.addr %s433, 256
        %s435 = scalar_lea.vmem [#allocation2], %s434
        // Predicated region
        $region73: #{model1_forward.1} parent=71 // pred_check
          %p436 = pneg %p52
        $region74: #{model1_forward.1} parent=71 // pred_check_branch
          %438 = sbr.rel (%p436) target = $region76
        $region75: #{model1_forward.1} parent=71 // pred_region
          %439 = dma.done %s432, 4096
        $region76: #{model1_forward.1} parent=71 // pred_fallthru
          _
        // Predicated region
        $region77: #{model1_forward.1} parent=71 // pred_check
          %p440 = pneg %p115
        $region78: #{model1_forward.1} parent=71 // pred_check_branch
          %442 = sbr.rel (%p440) target = $region80
        $region79: #{model1_forward.1} parent=71 // pred_region
          %443 = dma.done [#allocation6], 2048
        $region80: #{model1_forward.1} parent=71 // pred_fallthru
          _
        %s444 = sand.u32 %s39, 1
        %s445 = scalar_lea.sflag [#allocation3], %s444
        %s446 = sand.u32 %s39, 1
        %s447 = smul.addr %s446, 256
        %s448 = scalar_lea.vmem [#allocation2], %s447
        %p449 = pneg %p52
        %p450 = pneg %p49
        %p451 = pneg %p73
        %p452 = pneg %p70
        %p453 = pneg %p94
        %p454 = pneg %p91
        %p455 = pneg %p115
        %p456 = pneg %p112
        %p457 = pneg %p136
        %p458 = pneg %p133
        %p459 = pneg %p157
        %p460 = pneg %p154
        %p461 = pneg %p178
        %p462 = pneg %p175
        %p463 = pneg %p199
        %p464 = pneg %p196
        %p465 = pneg %p220
        %p466 = pneg %p217
        %p467 = pneg %p241
        %p468 = pneg %p238
        %p469 = pneg %p262
        %p470 = pneg %p259
        %p471 = pneg %p283
        %p472 = pneg %p280
        %p473 = pneg %p304
        %p474 = pneg %p301
        %p475 = pneg %p330
        %p476 = pneg %p327
        %s477 = sand.u32 %s317, 1
        %s478 = scalar_lea.sflag [#allocation4], %s477
        %s479 = sand.u32 %s317, 1
        %s480 = smul.addr %s479, 128
        %s481 = scalar_lea.vmem [#allocation7], %s480
        %s482 = smul.u32 16, %s31
        %s483 = ssub.s32 25, %s482
        %p484 = scmp.lt.s32.totalorder %s483, 16
        %s485 = scalar_select %p484, %s483, 16
        %s486 = smul.u32 128, %s485
        %s487 = smul.u32 %s486, 2
        %s488 = smul.u32 16, %s31
        %s489 = ssub.s32 25, %s488
        %p490 = scmp.lt.s32.totalorder %s489, 16
        %s491 = scalar_select %p490, %s489, 16
        %s492 = smul.u32 128, %s491
        %v494 = vld [vmem:[%s435] sm:$0xff]
        %v495 = vld [vmem:[%s435 + $0x8] sm:$0xff]
        %v496 = vld [vmem:[%s435 + $0x10] sm:$0xff]
        %v497 = vld [vmem:[%s435 + $0x18] sm:$0xff]
        %v498 = vld [vmem:[%s435 + $0x20] sm:$0xff]
        %v499 = vld [vmem:[%s435 + $0x28] sm:$0xff]
        %v500 = vld [vmem:[%s435 + $0x30] sm:$0xff]
        %v501 = vld [vmem:[%s435 + $0x38] sm:$0xff]
        %v502 = vld [vmem:[%s435 + $0x40] sm:$0xff]
        %v503 = vld [vmem:[%s435 + $0x48] sm:$0xff]
        %v504 = vld [vmem:[%s435 + $0x50] sm:$0xff]
        %v505 = vld [vmem:[%s435 + $0x58] sm:$0xff]
        %v506 = vld [vmem:[%s435 + $0x60] sm:$0xff]
        %v507 = vld [vmem:[%s435 + $0x68] sm:$0xff]
        %v508 = vld [vmem:[%s435 + $0x70] sm:$0xff]
        %v509 = vld [vmem:[%s435 + $0x78] sm:$0xff]
        %v510 = vld [vmem:[%s435 + $0x80] sm:$0xff]
        %v511 = vld [vmem:[%s435 + $0x88] sm:$0xff]
        %v512 = vld [vmem:[%s435 + $0x90] sm:$0xff]
        %v513 = vld [vmem:[%s435 + $0x98] sm:$0xff]
        %v514 = vld [vmem:[%s435 + $0xa0] sm:$0xff]
        %v515 = vld [vmem:[%s435 + $0xa8] sm:$0xff]
        %v516 = vld [vmem:[%s435 + $0xb0] sm:$0xff]
        %v517 = vld [vmem:[%s435 + $0xb8] sm:$0xff]
        %v518 = vld [vmem:[%s435 + $0xc0] sm:$0xff]
        %v519 = vld [vmem:[%s435 + $0xc8] sm:$0xff]
        %v520 = vld [vmem:[%s435 + $0xd0] sm:$0xff]
        %v521 = vld [vmem:[%s435 + $0xd8] sm:$0xff]
        %v522 = vld [vmem:[%s435 + $0xe0] sm:$0xff]
        %v523 = vld [vmem:[%s435 + $0xe8] sm:$0xff]
        %v524 = vld [vmem:[%s435 + $0xf0] sm:$0xff]
        %v525 = vld [vmem:[%s435 + $0xf8] sm:$0xff]
        %v526 = vld [vmem:[%s1] sm:$0x3]
        %v527 = vld [vmem:[%s2] sm:$0x3]
        %v528 = vadd.f32 %v494, %v495
        %529 = vadd.xlane.f32.xlu0 %v528
        %v530 = vpop.xlane.xlu0 %529
        %v531 = vadd.f32 %v496, %v497
        %532 = vadd.xlane.f32.xlu0 %v531
        %v533 = vpop.xlane.xlu0 %532
        %v534 = vadd.f32 %v498, %v499
        %535 = vadd.xlane.f32.xlu0 %v534
        %v536 = vpop.xlane.xlu0 %535
        %v537 = vadd.f32 %v500, %v501
        %538 = vadd.xlane.f32.xlu0 %v537
        %v539 = vpop.xlane.xlu0 %538
        %v540 = vadd.f32 %v502, %v503
        %541 = vadd.xlane.f32.xlu0 %v540
        %v542 = vpop.xlane.xlu0 %541
        %v543 = vadd.f32 %v504, %v505
        %544 = vadd.xlane.f32.xlu0 %v543
        %v545 = vpop.xlane.xlu0 %544
        %v546 = vadd.f32 %v506, %v507
        %547 = vadd.xlane.f32.xlu0 %v546
        %v548 = vpop.xlane.xlu0 %547
        %v549 = vadd.f32 %v508, %v509
        %550 = vadd.xlane.f32.xlu0 %v549
        %v551 = vpop.xlane.xlu0 %550
        %v552 = vadd.f32 %v510, %v511
        %553 = vadd.xlane.f32.xlu0 %v552
        %v554 = vpop.xlane.xlu0 %553
        %v555 = vadd.f32 %v512, %v513
        %556 = vadd.xlane.f32.xlu0 %v555
        %v557 = vpop.xlane.xlu0 %556
        %v558 = vadd.f32 %v514, %v515
        %559 = vadd.xlane.f32.xlu0 %v558
        %v560 = vpop.xlane.xlu0 %559
        %v561 = vadd.f32 %v516, %v517
        %562 = vadd.xlane.f32.xlu0 %v561
        %v563 = vpop.xlane.xlu0 %562
        %v564 = vadd.f32 %v518, %v519
        %565 = vadd.xlane.f32.xlu0 %v564
        %v566 = vpop.xlane.xlu0 %565
        %v567 = vadd.f32 %v520, %v521
        %568 = vadd.xlane.f32.xlu0 %v567
        %v569 = vpop.xlane.xlu0 %568
        %v570 = vadd.f32 %v522, %v523
        %571 = vadd.xlane.f32.xlu0 %v570
        %v572 = vpop.xlane.xlu0 %571
        %v573 = vadd.f32 %v524, %v525
        %574 = vadd.xlane.f32.xlu0 %v573
        %v575 = vpop.xlane.xlu0 %574
        %v576 = vrcp.pop 256.0
        %v577 = vmul.f32 %v530, %v576
        %v578 = vmul.f32 %v533, %v576
        %v579 = vmul.f32 %v536, %v576
        %v580 = vmul.f32 %v539, %v576
        %v581 = vmul.f32 %v542, %v576
        %v582 = vmul.f32 %v545, %v576
        %v583 = vmul.f32 %v548, %v576
        %v584 = vmul.f32 %v551, %v576
        %v585 = vmul.f32 %v554, %v576
        %v586 = vmul.f32 %v557, %v576
        %v587 = vmul.f32 %v560, %v576
        %v588 = vmul.f32 %v563, %v576
        %v589 = vmul.f32 %v566, %v576
        %v590 = vmul.f32 %v569, %v576
        %v591 = vmul.f32 %v572, %v576
        %v592 = vmul.f32 %v575, %v576
        %v593 = vmul.f32 %v494, %v494
        %v594 = vmul.f32 %v495, %v495
        %v595 = vmul.f32 %v496, %v496
        %v596 = vmul.f32 %v497, %v497
        %v597 = vmul.f32 %v498, %v498
        %v598 = vmul.f32 %v499, %v499
        %v599 = vmul.f32 %v500, %v500
        %v600 = vmul.f32 %v501, %v501
        %v601 = vmul.f32 %v502, %v502
        %v602 = vmul.f32 %v503, %v503
        %v603 = vmul.f32 %v504, %v504
        %v604 = vmul.f32 %v505, %v505
        %v605 = vmul.f32 %v506, %v506
        %v606 = vmul.f32 %v507, %v507
        %v607 = vmul.f32 %v508, %v508
        %v608 = vmul.f32 %v509, %v509
        %v609 = vmul.f32 %v510, %v510
        %v610 = vmul.f32 %v511, %v511
        %v611 = vmul.f32 %v512, %v512
        %v612 = vmul.f32 %v513, %v513
        %v613 = vmul.f32 %v514, %v514
        %v614 = vmul.f32 %v515, %v515
        %v615 = vmul.f32 %v516, %v516
        %v616 = vmul.f32 %v517, %v517
        %v617 = vmul.f32 %v518, %v518
        %v618 = vmul.f32 %v519, %v519
        %v619 = vmul.f32 %v520, %v520
        %v620 = vmul.f32 %v521, %v521
        %v621 = vmul.f32 %v522, %v522
        %v622 = vmul.f32 %v523, %v523
        %v623 = vmul.f32 %v524, %v524
        %v624 = vmul.f32 %v525, %v525
        %v625 = vadd.f32 %v593, %v594
        %626 = vadd.xlane.f32.xlu0 %v625
        %v627 = vpop.xlane.xlu0 %626
        %v628 = vadd.f32 %v595, %v596
        %629 = vadd.xlane.f32.xlu0 %v628
        %v630 = vpop.xlane.xlu0 %629
        %v631 = vadd.f32 %v597, %v598
        %632 = vadd.xlane.f32.xlu0 %v631
        %v633 = vpop.xlane.xlu0 %632
        %v634 = vadd.f32 %v599, %v600
        %635 = vadd.xlane.f32.xlu0 %v634
        %v636 = vpop.xlane.xlu0 %635
        %v637 = vadd.f32 %v601, %v602
        %638 = vadd.xlane.f32.xlu0 %v637
        %v639 = vpop.xlane.xlu0 %638
        %v640 = vadd.f32 %v603, %v604
        %641 = vadd.xlane.f32.xlu0 %v640
        %v642 = vpop.xlane.xlu0 %641
        %v643 = vadd.f32 %v605, %v606
        %644 = vadd.xlane.f32.xlu0 %v643
        %v645 = vpop.xlane.xlu0 %644
        %v646 = vadd.f32 %v607, %v608
        %647 = vadd.xlane.f32.xlu0 %v646
        %v648 = vpop.xlane.xlu0 %647
        %v649 = vadd.f32 %v609, %v610
        %650 = vadd.xlane.f32.xlu0 %v649
        %v651 = vpop.xlane.xlu0 %650
        %v652 = vadd.f32 %v611, %v612
        %653 = vadd.xlane.f32.xlu0 %v652
        %v654 = vpop.xlane.xlu0 %653
        %v655 = vadd.f32 %v613, %v614
        %656 = vadd.xlane.f32.xlu0 %v655
        %v657 = vpop.xlane.xlu0 %656
        %v658 = vadd.f32 %v615, %v616
        %659 = vadd.xlane.f32.xlu0 %v658
        %v660 = vpop.xlane.xlu0 %659
        %v661 = vadd.f32 %v617, %v618
        %662 = vadd.xlane.f32.xlu0 %v661
        %v663 = vpop.xlane.xlu0 %662
        %v664 = vadd.f32 %v619, %v620
        %665 = vadd.xlane.f32.xlu0 %v664
        %v666 = vpop.xlane.xlu0 %665
        %v667 = vadd.f32 %v621, %v622
        %668 = vadd.xlane.f32.xlu0 %v667
        %v669 = vpop.xlane.xlu0 %668
        %v670 = vadd.f32 %v623, %v624
        %671 = vadd.xlane.f32.xlu0 %v670
        %v672 = vpop.xlane.xlu0 %671
        %v673 = vmul.f32 %v627, %v576
        %v674 = vmul.f32 %v630, %v576
        %v675 = vmul.f32 %v633, %v576
        %v676 = vmul.f32 %v636, %v576
        %v677 = vmul.f32 %v639, %v576
        %v678 = vmul.f32 %v642, %v576
        %v679 = vmul.f32 %v645, %v576
        %v680 = vmul.f32 %v648, %v576
        %v681 = vmul.f32 %v651, %v576
        %v682 = vmul.f32 %v654, %v576
        %v683 = vmul.f32 %v657, %v576
        %v684 = vmul.f32 %v660, %v576
        %v685 = vmul.f32 %v663, %v576
        %v686 = vmul.f32 %v666, %v576
        %v687 = vmul.f32 %v669, %v576
        %v688 = vmul.f32 %v672, %v576
        %v689 = vmul.f32 %v577, %v577
        %v690 = vmul.f32 %v578, %v578
        %v691 = vmul.f32 %v579, %v579
        %v692 = vmul.f32 %v580, %v580
        %v693 = vmul.f32 %v581, %v581
        %v694 = vmul.f32 %v582, %v582
        %v695 = vmul.f32 %v583, %v583
        %v696 = vmul.f32 %v584, %v584
        %v697 = vmul.f32 %v585, %v585
        %v698 = vmul.f32 %v586, %v586
        %v699 = vmul.f32 %v587, %v587
        %v700 = vmul.f32 %v588, %v588
        %v701 = vmul.f32 %v589, %v589
        %v702 = vmul.f32 %v590, %v590
        %v703 = vmul.f32 %v591, %v591
        %v704 = vmul.f32 %v592, %v592
        %v705 = vsub.f32 %v673, %v689
        %v706 = vsub.f32 %v674, %v690
        %v707 = vsub.f32 %v675, %v691
        %v708 = vsub.f32 %v676, %v692
        %v709 = vsub.f32 %v677, %v693
        %v710 = vsub.f32 %v678, %v694
        %v711 = vsub.f32 %v679, %v695
        %v712 = vsub.f32 %v680, %v696
        %v713 = vsub.f32 %v681, %v697
        %v714 = vsub.f32 %v682, %v698
        %v715 = vsub.f32 %v683, %v699
        %v716 = vsub.f32 %v684, %v700
        %v717 = vsub.f32 %v685, %v701
        %v718 = vsub.f32 %v686, %v702
        %v719 = vsub.f32 %v687, %v703
        %v720 = vsub.f32 %v688, %v704
        %v721 = vmax.f32 %v705, 0.0
        %v722 = vmax.f32 %v706, 0.0
        %v723 = vmax.f32 %v707, 0.0
        %v724 = vmax.f32 %v708, 0.0
        %v725 = vmax.f32 %v709, 0.0
        %v726 = vmax.f32 %v710, 0.0
        %v727 = vmax.f32 %v711, 0.0
        %v728 = vmax.f32 %v712, 0.0
        %v729 = vmax.f32 %v713, 0.0
        %v730 = vmax.f32 %v714, 0.0
        %v731 = vmax.f32 %v715, 0.0
        %v732 = vmax.f32 %v716, 0.0
        %v733 = vmax.f32 %v717, 0.0
        %v734 = vmax.f32 %v718, 0.0
        %v735 = vmax.f32 %v719, 0.0
        %v736 = vmax.f32 %v720, 0.0
        %v737 = vadd.f32 %v721, 1e-05
        %v738 = vadd.f32 %v722, 1e-05
        %v739 = vadd.f32 %v723, 1e-05
        %v740 = vadd.f32 %v724, 1e-05
        %v741 = vadd.f32 %v725, 1e-05
        %v742 = vadd.f32 %v726, 1e-05
        %v743 = vadd.f32 %v727, 1e-05
        %v744 = vadd.f32 %v728, 1e-05
        %v745 = vadd.f32 %v729, 1e-05
        %v746 = vadd.f32 %v730, 1e-05
        %v747 = vadd.f32 %v731, 1e-05
        %v748 = vadd.f32 %v732, 1e-05
        %v749 = vadd.f32 %v733, 1e-05
        %v750 = vadd.f32 %v734, 1e-05
        %v751 = vadd.f32 %v735, 1e-05
        %v752 = vadd.f32 %v736, 1e-05
        %v753 = vrsqrt.pop %v737
        %v754 = vrsqrt.pop %v738
        %v755 = vrsqrt.pop %v739
        %v756 = vrsqrt.pop %v740
        %v757 = vrsqrt.pop %v741
        %v758 = vrsqrt.pop %v742
        %v759 = vrsqrt.pop %v743
        %v760 = vrsqrt.pop %v744
        %v761 = vrsqrt.pop %v745
        %v762 = vrsqrt.pop %v746
        %v763 = vrsqrt.pop %v747
        %v764 = vrsqrt.pop %v748
        %v765 = vrsqrt.pop %v749
        %v766 = vrsqrt.pop %v750
        %v767 = vrsqrt.pop %v751
        %v768 = vrsqrt.pop %v752
        %v769 = vmul.f32 %v737, 0.5
        %v770 = vmul.f32 %v738, 0.5
        %v771 = vmul.f32 %v739, 0.5
        %v772 = vmul.f32 %v740, 0.5
        %v773 = vmul.f32 %v741, 0.5
        %v774 = vmul.f32 %v742, 0.5
        %v775 = vmul.f32 %v743, 0.5
        %v776 = vmul.f32 %v744, 0.5
        %v777 = vmul.f32 %v745, 0.5
        %v778 = vmul.f32 %v746, 0.5
        %v779 = vmul.f32 %v747, 0.5
        %v780 = vmul.f32 %v748, 0.5
        %v781 = vmul.f32 %v749, 0.5
        %v782 = vmul.f32 %v750, 0.5
        %v783 = vmul.f32 %v751, 0.5
        %v784 = vmul.f32 %v752, 0.5
        %v785 = vmul.f32 %v769, %v753
        %v786 = vmul.f32 %v770, %v754
        %v787 = vmul.f32 %v771, %v755
        %v788 = vmul.f32 %v772, %v756
        %v789 = vmul.f32 %v773, %v757
        %v790 = vmul.f32 %v774, %v758
        %v791 = vmul.f32 %v775, %v759
        %v792 = vmul.f32 %v776, %v760
        %v793 = vmul.f32 %v777, %v761
        %v794 = vmul.f32 %v778, %v762
        %v795 = vmul.f32 %v779, %v763
        %v796 = vmul.f32 %v780, %v764
        %v797 = vmul.f32 %v781, %v765
        %v798 = vmul.f32 %v782, %v766
        %v799 = vmul.f32 %v783, %v767
        %v800 = vmul.f32 %v784, %v768
        %v801 = vmul.f32 %v785, %v753
        %v802 = vmul.f32 %v786, %v754
        %v803 = vmul.f32 %v787, %v755
        %v804 = vmul.f32 %v788, %v756
        %v805 = vmul.f32 %v789, %v757
        %v806 = vmul.f32 %v790, %v758
        %v807 = vmul.f32 %v791, %v759
        %v808 = vmul.f32 %v792, %v760
        %v809 = vmul.f32 %v793, %v761
        %v810 = vmul.f32 %v794, %v762
        %v811 = vmul.f32 %v795, %v763
        %v812 = vmul.f32 %v796, %v764
        %v813 = vmul.f32 %v797, %v765
        %v814 = vmul.f32 %v798, %v766
        %v815 = vmul.f32 %v799, %v767
        %v816 = vmul.f32 %v800, %v768
        %v817 = vsub.f32 1.5, %v801
        %v818 = vsub.f32 1.5, %v802
        %v819 = vsub.f32 1.5, %v803
        %v820 = vsub.f32 1.5, %v804
        %v821 = vsub.f32 1.5, %v805
        %v822 = vsub.f32 1.5, %v806
        %v823 = vsub.f32 1.5, %v807
        %v824 = vsub.f32 1.5, %v808
        %v825 = vsub.f32 1.5, %v809
        %v826 = vsub.f32 1.5, %v810
        %v827 = vsub.f32 1.5, %v811
        %v828 = vsub.f32 1.5, %v812
        %v829 = vsub.f32 1.5, %v813
        %v830 = vsub.f32 1.5, %v814
        %v831 = vsub.f32 1.5, %v815
        %v832 = vsub.f32 1.5, %v816
        %v833 = vmul.f32 %v753, %v817
        %v834 = vmul.f32 %v754, %v818
        %v835 = vmul.f32 %v755, %v819
        %v836 = vmul.f32 %v756, %v820
        %v837 = vmul.f32 %v757, %v821
        %v838 = vmul.f32 %v758, %v822
        %v839 = vmul.f32 %v759, %v823
        %v840 = vmul.f32 %v760, %v824
        %v841 = vmul.f32 %v761, %v825
        %v842 = vmul.f32 %v762, %v826
        %v843 = vmul.f32 %v763, %v827
        %v844 = vmul.f32 %v764, %v828
        %v845 = vmul.f32 %v765, %v829
        %v846 = vmul.f32 %v766, %v830
        %v847 = vmul.f32 %v767, %v831
        %v848 = vmul.f32 %v768, %v832
        %v849 = vsub.f32 %v494, %v577
        %v850 = vsub.f32 %v495, %v577
        %v851 = vsub.f32 %v496, %v578
        %v852 = vsub.f32 %v497, %v578
        %v853 = vsub.f32 %v498, %v579
        %v854 = vsub.f32 %v499, %v579
        %v855 = vsub.f32 %v500, %v580
        %v856 = vsub.f32 %v501, %v580
        %v857 = vsub.f32 %v502, %v581
        %v858 = vsub.f32 %v503, %v581
        %v859 = vsub.f32 %v504, %v582
        %v860 = vsub.f32 %v505, %v582
        %v861 = vsub.f32 %v506, %v583
        %v862 = vsub.f32 %v507, %v583
        %v863 = vsub.f32 %v508, %v584
        %v864 = vsub.f32 %v509, %v584
        %v865 = vsub.f32 %v510, %v585
        %v866 = vsub.f32 %v511, %v585
        %v867 = vsub.f32 %v512, %v586
        %v868 = vsub.f32 %v513, %v586
        %v869 = vsub.f32 %v514, %v587
        %v870 = vsub.f32 %v515, %v587
        %v871 = vsub.f32 %v516, %v588
        %v872 = vsub.f32 %v517, %v588
        %v873 = vsub.f32 %v518, %v589
        %v874 = vsub.f32 %v519, %v589
        %v875 = vsub.f32 %v520, %v590
        %v876 = vsub.f32 %v521, %v590
        %v877 = vsub.f32 %v522, %v591
        %v878 = vsub.f32 %v523, %v591
        %v879 = vsub.f32 %v524, %v592
        %v880 = vsub.f32 %v525, %v592
        %v881 = vmul.f32 %v849, %v833
        %v882 = vmul.f32 %v850, %v833
        %v883 = vmul.f32 %v851, %v834
        %v884 = vmul.f32 %v852, %v834
        %v885 = vmul.f32 %v853, %v835
        %v886 = vmul.f32 %v854, %v835
        %v887 = vmul.f32 %v855, %v836
        %v888 = vmul.f32 %v856, %v836
        %v889 = vmul.f32 %v857, %v837
        %v890 = vmul.f32 %v858, %v837
        %v891 = vmul.f32 %v859, %v838
        %v892 = vmul.f32 %v860, %v838
        %v893 = vmul.f32 %v861, %v839
        %v894 = vmul.f32 %v862, %v839
        %v895 = vmul.f32 %v863, %v840
        %v896 = vmul.f32 %v864, %v840
        %v897 = vmul.f32 %v865, %v841
        %v898 = vmul.f32 %v866, %v841
        %v899 = vmul.f32 %v867, %v842
        %v900 = vmul.f32 %v868, %v842
        %v901 = vmul.f32 %v869, %v843
        %v902 = vmul.f32 %v870, %v843
        %v903 = vmul.f32 %v871, %v844
        %v904 = vmul.f32 %v872, %v844
        %v905 = vmul.f32 %v873, %v845
        %v906 = vmul.f32 %v874, %v845
        %v907 = vmul.f32 %v875, %v846
        %v908 = vmul.f32 %v876, %v846
        %v909 = vmul.f32 %v877, %v847
        %v910 = vmul.f32 %v878, %v847
        %v911 = vmul.f32 %v879, %v848
        %v912 = vmul.f32 %v880, %v848
        %v914 = vlaneseq
        %v915 = vshrl.u32 %v914, 7
        %v916 = vsub.s32 0, %v915
        %v917 = vrot.slane %v526, %v916
        %v918 = vlaneseq
        %v919 = vshrl.u32 %v918, 7
        %v920 = vsub.s32 1, %v919
        %v921 = vrot.slane %v526, %v920
        %v924 = vmul.f32 %v881, %v917
        %v925 = vmul.f32 %v882, %v921
        %v926 = vmul.f32 %v883, %v917
        %v927 = vmul.f32 %v884, %v921
        %v928 = vmul.f32 %v885, %v917
        %v929 = vmul.f32 %v886, %v921
        %v930 = vmul.f32 %v887, %v917
        %v931 = vmul.f32 %v888, %v921
        %v932 = vmul.f32 %v889, %v917
        %v933 = vmul.f32 %v890, %v921
        %v934 = vmul.f32 %v891, %v917
        %v935 = vmul.f32 %v892, %v921
        %v936 = vmul.f32 %v893, %v917
        %v937 = vmul.f32 %v894, %v921
        %v938 = vmul.f32 %v895, %v917
        %v939 = vmul.f32 %v896, %v921
        %v940 = vmul.f32 %v897, %v917
        %v941 = vmul.f32 %v898, %v921
        %v942 = vmul.f32 %v899, %v917
        %v943 = vmul.f32 %v900, %v921
        %v944 = vmul.f32 %v901, %v917
        %v945 = vmul.f32 %v902, %v921
        %v946 = vmul.f32 %v903, %v917
        %v947 = vmul.f32 %v904, %v921
        %v948 = vmul.f32 %v905, %v917
        %v949 = vmul.f32 %v906, %v921
        %v950 = vmul.f32 %v907, %v917
        %v951 = vmul.f32 %v908, %v921
        %v952 = vmul.f32 %v909, %v917
        %v953 = vmul.f32 %v910, %v921
        %v954 = vmul.f32 %v911, %v917
        %v955 = vmul.f32 %v912, %v921
        %v957 = vlaneseq
        %v958 = vshrl.u32 %v957, 7
        %v959 = vsub.s32 0, %v958
        %v960 = vrot.slane %v527, %v959
        %v961 = vlaneseq
        %v962 = vshrl.u32 %v961, 7
        %v963 = vsub.s32 1, %v962
        %v964 = vrot.slane %v527, %v963
        %v967 = vadd.f32 %v924, %v960
        %v968 = vadd.f32 %v925, %v964
        %v969 = vadd.f32 %v926, %v960
        %v970 = vadd.f32 %v927, %v964
        %v971 = vadd.f32 %v928, %v960
        %v972 = vadd.f32 %v929, %v964
        %v973 = vadd.f32 %v930, %v960
        %v974 = vadd.f32 %v931, %v964
        %v975 = vadd.f32 %v932, %v960
        %v976 = vadd.f32 %v933, %v964
        %v977 = vadd.f32 %v934, %v960
        %v978 = vadd.f32 %v935, %v964
        %v979 = vadd.f32 %v936, %v960
        %v980 = vadd.f32 %v937, %v964
        %v981 = vadd.f32 %v938, %v960
        %v982 = vadd.f32 %v939, %v964
        %v983 = vadd.f32 %v940, %v960
        %v984 = vadd.f32 %v941, %v964
        %v985 = vadd.f32 %v942, %v960
        %v986 = vadd.f32 %v943, %v964
        %v987 = vadd.f32 %v944, %v960
        %v988 = vadd.f32 %v945, %v964
        %v989 = vadd.f32 %v946, %v960
        %v990 = vadd.f32 %v947, %v964
        %v991 = vadd.f32 %v948, %v960
        %v992 = vadd.f32 %v949, %v964
        %v993 = vadd.f32 %v950, %v960
        %v994 = vadd.f32 %v951, %v964
        %v995 = vadd.f32 %v952, %v960
        %v996 = vadd.f32 %v953, %v964
        %v997 = vadd.f32 %v954, %v960
        %v998 = vadd.f32 %v955, %v964
        %v999 = vpack.c.bf16 %v969, %v967
        %v1000 = vpack.c.bf16 %v970, %v968
        %v1001 = vpack.c.bf16 %v973, %v971
        %v1002 = vpack.c.bf16 %v974, %v972
        %v1003 = vpack.c.bf16 %v977, %v975
        %v1004 = vpack.c.bf16 %v978, %v976
        %v1005 = vpack.c.bf16 %v981, %v979
        %v1006 = vpack.c.bf16 %v982, %v980
        %v1007 = vpack.c.bf16 %v985, %v983
        %v1008 = vpack.c.bf16 %v986, %v984
        %v1009 = vpack.c.bf16 %v989, %v987
        %v1010 = vpack.c.bf16 %v990, %v988
        %v1011 = vpack.c.bf16 %v993, %v991
        %v1012 = vpack.c.bf16 %v994, %v992
        %v1013 = vpack.c.bf16 %v997, %v995
        %v1014 = vpack.c.bf16 %v998, %v996
        %v1015 = vld [vmem:[#allocation5] sm:$0xf]
        %v1016 = vld [vmem:[#allocation5 + $0x4] sm:$0xf]
        %v1017 = vld [vmem:[#allocation5 + $0x8] sm:$0xf]
        %v1018 = vld [vmem:[#allocation5 + $0xc] sm:$0xf]
        %v1019 = vld [vmem:[#allocation5 + $0x10] sm:$0xf]
        %v1020 = vld [vmem:[#allocation5 + $0x14] sm:$0xf]
        %v1021 = vld [vmem:[#allocation5 + $0x18] sm:$0xf]
        %v1022 = vld [vmem:[#allocation5 + $0x1c] sm:$0xf]
        %v1023 = vld [vmem:[#allocation5 + $0x20] sm:$0xf]
        %v1024 = vld [vmem:[#allocation5 + $0x24] sm:$0xf]
        %v1025 = vld [vmem:[#allocation5 + $0x28] sm:$0xf]
        %v1026 = vld [vmem:[#allocation5 + $0x2c] sm:$0xf]
        %v1027 = vld [vmem:[#allocation5 + $0x30] sm:$0xf]
        %v1028 = vld [vmem:[#allocation5 + $0x34] sm:$0xf]
        %v1029 = vld [vmem:[#allocation5 + $0x38] sm:$0xf]
        %v1030 = vld [vmem:[#allocation5 + $0x3c] sm:$0xf]
        %v1031 = vld [vmem:[#allocation5 + $0x40] sm:$0xf]
        %v1032 = vld [vmem:[#allocation5 + $0x44] sm:$0xf]
        %v1033 = vld [vmem:[#allocation5 + $0x48] sm:$0xf]
        %v1034 = vld [vmem:[#allocation5 + $0x4c] sm:$0xf]
        %v1035 = vld [vmem:[#allocation5 + $0x50] sm:$0xf]
        %v1036 = vld [vmem:[#allocation5 + $0x54] sm:$0xf]
        %v1037 = vld [vmem:[#allocation5 + $0x58] sm:$0xf]
        %v1038 = vld [vmem:[#allocation5 + $0x5c] sm:$0xf]
        %v1039 = vld [vmem:[#allocation5 + $0x60] sm:$0xf]
        %v1040 = vld [vmem:[#allocation5 + $0x64] sm:$0xf]
        %v1041 = vld [vmem:[#allocation5 + $0x68] sm:$0xf]
        %v1042 = vld [vmem:[#allocation5 + $0x6c] sm:$0xf]
        %v1043 = vld [vmem:[#allocation5 + $0x70] sm:$0xf]
        %v1044 = vld [vmem:[#allocation5 + $0x74] sm:$0xf]
        %v1045 = vld [vmem:[#allocation5 + $0x78] sm:$0xf]
        %v1046 = vld [vmem:[#allocation5 + $0x7c] sm:$0xf]
        %v1047 = vld [vmem:[%s4] sm:$0x1]
        %v1049 = vlaneseq
        %v1050 = vshrl.u32 %v1049, 7
        %v1051 = vsub.s32 0, %v1050
        %v1052 = vrot.slane %v1047, %v1051
        %v1086 = vunpack.c.l.b16 %v1015
        %v1087 = vunpack.c.l.b16 %v1016
        %v1088 = vunpack.c.l.b16 %v1017
        %v1089 = vunpack.c.l.b16 %v1018
        %v1090 = vunpack.c.l.b16 %v1019
        %v1091 = vunpack.c.l.b16 %v1020
        %v1092 = vunpack.c.l.b16 %v1021
        %v1093 = vunpack.c.l.b16 %v1022
        %v1094 = vunpack.c.l.b16 %v1023
        %v1095 = vunpack.c.l.b16 %v1024
        %v1096 = vunpack.c.l.b16 %v1025
        %v1097 = vunpack.c.l.b16 %v1026
        %v1098 = vunpack.c.l.b16 %v1027
        %v1099 = vunpack.c.l.b16 %v1028
        %v1100 = vunpack.c.l.b16 %v1029
        %v1101 = vunpack.c.l.b16 %v1030
        %v1102 = vunpack.c.l.b16 %v1031
        %v1103 = vunpack.c.l.b16 %v1032
        %v1104 = vunpack.c.l.b16 %v1033
        %v1105 = vunpack.c.l.b16 %v1034
        %v1106 = vunpack.c.l.b16 %v1035
        %v1107 = vunpack.c.l.b16 %v1036
        %v1108 = vunpack.c.l.b16 %v1037
        %v1109 = vunpack.c.l.b16 %v1038
        %v1110 = vunpack.c.l.b16 %v1039
        %v1111 = vunpack.c.l.b16 %v1040
        %v1112 = vunpack.c.l.b16 %v1041
        %v1113 = vunpack.c.l.b16 %v1042
        %v1114 = vunpack.c.l.b16 %v1043
        %v1115 = vunpack.c.l.b16 %v1044
        %v1116 = vunpack.c.l.b16 %v1045
        %v1117 = vunpack.c.l.b16 %v1046
        %v1118 = vpack.c.b16 %v1087, %v1086
        %v1119 = vpack.c.b16 %v1089, %v1088
        %v1120 = vpack.c.b16 %v1091, %v1090
        %v1121 = vpack.c.b16 %v1093, %v1092
        %v1122 = vpack.c.b16 %v1095, %v1094
        %v1123 = vpack.c.b16 %v1097, %v1096
        %v1124 = vpack.c.b16 %v1099, %v1098
        %v1125 = vpack.c.b16 %v1101, %v1100
        %v1126 = vpack.c.b16 %v1103, %v1102
        %v1127 = vpack.c.b16 %v1105, %v1104
        %v1128 = vpack.c.b16 %v1107, %v1106
        %v1129 = vpack.c.b16 %v1109, %v1108
        %v1130 = vpack.c.b16 %v1111, %v1110
        %v1131 = vpack.c.b16 %v1113, %v1112
        %v1132 = vpack.c.b16 %v1115, %v1114
        %v1133 = vpack.c.b16 %v1117, %v1116
        %1150 = vmatprep.subr.bf16.mxu0 0
        %1151 = vmatpush1.bf16.msra.mxu0 %v1125
        %1152 = vmatprep.subr.bf16.mxu0 0
        %1153 = vmatpush1.bf16.msra.mxu0 %v1124
        %1154 = vmatprep.subr.bf16.mxu0 0
        %1155 = vmatpush1.bf16.msra.mxu0 %v1123
        %1156 = vmatprep.subr.bf16.mxu0 0
        %1157 = vmatpush1.bf16.msra.mxu0 %v1122
        %1158 = vmatprep.subr.bf16.mxu0 0
        %1159 = vmatpush1.bf16.msra.mxu0 %v1121
        %1160 = vmatprep.subr.bf16.mxu0 0
        %1161 = vmatpush1.bf16.msra.mxu0 %v1120
        %1162 = vmatprep.subr.bf16.mxu0 0
        %1163 = vmatpush1.bf16.msra.mxu0 %v1119
        %1164 = vmatprep.subr.bf16.mxu0 0
        %1165 = vmatpush1.bf16.msra.mxu0 %v1118
        %1166 = vmatprep.subr.bf16.mxu0 0
        %1167 = vmatpush2.bf16.msra.mxu0 %v1133
        %1168 = vmatprep.subr.bf16.mxu0 0
        %1169 = vmatpush2.bf16.msra.mxu0 %v1132
        %1170 = vmatprep.subr.bf16.mxu0 0
        %1171 = vmatpush2.bf16.msra.mxu0 %v1131
        %1172 = vmatprep.subr.bf16.mxu0 0
        %1173 = vmatpush2.bf16.msra.mxu0 %v1130
        %1174 = vmatprep.subr.bf16.mxu0 0
        %1175 = vmatpush2.bf16.msra.mxu0 %v1129
        %1176 = vmatprep.subr.bf16.mxu0 0
        %1177 = vmatpush2.bf16.msra.mxu0 %v1128
        %1178 = vmatprep.subr.bf16.mxu0 0
        %1179 = vmatpush2.bf16.msra.mxu0 %v1127
        %1180 = vmatprep.subr.bf16.mxu0 0
        %1181 = vmatpush2.bf16.msra.mxu0 %v1126
        %1182 = vmatprep.mubr.bf16.mxu0 %v1000
        %1183 = vmatmul.mubr.bf16.gmra.mxu0 %v999
        %v1184 = vpop.f32.mrf.mxu0
        %v1185 = vadd.f32 %v1052, %v1184
        %v1186 = vpop.f32.mrf.mxu0
        %v1187 = vpop.f32.mrf.mxu0
        %v1188 = vadd.f32 %v1052, %v1187
        %v1189 = vpop.f32.mrf.mxu0
        %1190 = vmatprep.mubr.bf16.mxu0 %v1002
        %1191 = vmatmul.mubr.bf16.gmra.mxu0 %v1001
        %v1192 = vpop.f32.mrf.mxu0
        %v1193 = vadd.f32 %v1052, %v1192
        %v1194 = vpop.f32.mrf.mxu0
        %v1195 = vpop.f32.mrf.mxu0
        %v1196 = vadd.f32 %v1052, %v1195
        %v1197 = vpop.f32.mrf.mxu0
        %1198 = vmatprep.mubr.bf16.mxu0 %v1004
        %1199 = vmatmul.mubr.bf16.gmra.mxu0 %v1003
        %v1200 = vpop.f32.mrf.mxu0
        %v1201 = vadd.f32 %v1052, %v1200
        %v1202 = vpop.f32.mrf.mxu0
        %v1203 = vpop.f32.mrf.mxu0
        %v1204 = vadd.f32 %v1052, %v1203
        %v1205 = vpop.f32.mrf.mxu0
        %1206 = vmatprep.mubr.bf16.mxu0 %v1006
        %1207 = vmatmul.mubr.bf16.gmra.mxu0 %v1005
        %v1208 = vpop.f32.mrf.mxu0
        %v1209 = vadd.f32 %v1052, %v1208
        %v1210 = vpop.f32.mrf.mxu0
        %v1211 = vpop.f32.mrf.mxu0
        %v1212 = vadd.f32 %v1052, %v1211
        %v1213 = vpop.f32.mrf.mxu0
        %1214 = vmatprep.mubr.bf16.mxu0 %v1008
        %1215 = vmatmul.mubr.bf16.gmra.mxu0 %v1007
        %v1216 = vpop.f32.mrf.mxu0
        %v1217 = vadd.f32 %v1052, %v1216
        %v1218 = vpop.f32.mrf.mxu0
        %v1219 = vpop.f32.mrf.mxu0
        %v1220 = vadd.f32 %v1052, %v1219
        %v1221 = vpop.f32.mrf.mxu0
        %1222 = vmatprep.mubr.bf16.mxu0 %v1010
        %1223 = vmatmul.mubr.bf16.gmra.mxu0 %v1009
        %v1224 = vpop.f32.mrf.mxu0
        %v1225 = vadd.f32 %v1052, %v1224
        %v1226 = vpop.f32.mrf.mxu0
        %v1227 = vpop.f32.mrf.mxu0
        %v1228 = vadd.f32 %v1052, %v1227
        %v1229 = vpop.f32.mrf.mxu0
        %1230 = vmatprep.mubr.bf16.mxu0 %v1012
        %1231 = vmatmul.mubr.bf16.gmra.mxu0 %v1011
        %v1232 = vpop.f32.mrf.mxu0
        %v1233 = vadd.f32 %v1052, %v1232
        %v1234 = vpop.f32.mrf.mxu0
        %v1235 = vpop.f32.mrf.mxu0
        %v1236 = vadd.f32 %v1052, %v1235
        %v1237 = vpop.f32.mrf.mxu0
        %1238 = vmatprep.mubr.bf16.mxu0 %v1014
        %1239 = vmatmul.mubr.bf16.gmra.mxu0 %v1013
        %v1240 = vpop.f32.mrf.mxu0
        %v1241 = vadd.f32 %v1052, %v1240
        %v1242 = vpop.f32.mrf.mxu0
        %v1243 = vpop.f32.mrf.mxu0
        %v1244 = vadd.f32 %v1052, %v1243
        %v1245 = vpop.f32.mrf.mxu0
        %1246 = vdwg.mxu0
        %v1247 = vld [vmem:[%s5] sm:$0x1]
        %v1248 = vld [vmem:[%s6] sm:$0x1]
        %1249 = vadd.xlane.f32.xlu0 %v1185
        %v1250 = vpop.xlane.xlu0 %1249
        %1251 = vadd.xlane.f32.xlu0 %v1188
        %v1252 = vpop.xlane.xlu0 %1251
        %1253 = vadd.xlane.f32.xlu0 %v1193
        %v1254 = vpop.xlane.xlu0 %1253
        %1255 = vadd.xlane.f32.xlu0 %v1196
        %v1256 = vpop.xlane.xlu0 %1255
        %1257 = vadd.xlane.f32.xlu0 %v1201
        %v1258 = vpop.xlane.xlu0 %1257
        %1259 = vadd.xlane.f32.xlu0 %v1204
        %v1260 = vpop.xlane.xlu0 %1259
        %1261 = vadd.xlane.f32.xlu0 %v1209
        %v1262 = vpop.xlane.xlu0 %1261
        %1263 = vadd.xlane.f32.xlu0 %v1212
        %v1264 = vpop.xlane.xlu0 %1263
        %1265 = vadd.xlane.f32.xlu0 %v1217
        %v1266 = vpop.xlane.xlu0 %1265
        %1267 = vadd.xlane.f32.xlu0 %v1220
        %v1268 = vpop.xlane.xlu0 %1267
        %1269 = vadd.xlane.f32.xlu0 %v1225
        %v1270 = vpop.xlane.xlu0 %1269
        %1271 = vadd.xlane.f32.xlu0 %v1228
        %v1272 = vpop.xlane.xlu0 %1271
        %1273 = vadd.xlane.f32.xlu0 %v1233
        %v1274 = vpop.xlane.xlu0 %1273
        %1275 = vadd.xlane.f32.xlu0 %v1236
        %v1276 = vpop.xlane.xlu0 %1275
        %1277 = vadd.xlane.f32.xlu0 %v1241
        %v1278 = vpop.xlane.xlu0 %1277
        %1279 = vadd.xlane.f32.xlu0 %v1244
        %v1280 = vpop.xlane.xlu0 %1279
        %v1281 = vrcp.pop 128.0
        %v1282 = vmul.f32 %v1250, %v1281
        %v1283 = vmul.f32 %v1252, %v1281
        %v1284 = vmul.f32 %v1254, %v1281
        %v1285 = vmul.f32 %v1256, %v1281
        %v1286 = vmul.f32 %v1258, %v1281
        %v1287 = vmul.f32 %v1260, %v1281
        %v1288 = vmul.f32 %v1262, %v1281
        %v1289 = vmul.f32 %v1264, %v1281
        %v1290 = vmul.f32 %v1266, %v1281
        %v1291 = vmul.f32 %v1268, %v1281
        %v1292 = vmul.f32 %v1270, %v1281
        %v1293 = vmul.f32 %v1272, %v1281
        %v1294 = vmul.f32 %v1274, %v1281
        %v1295 = vmul.f32 %v1276, %v1281
        %v1296 = vmul.f32 %v1278, %v1281
        %v1297 = vmul.f32 %v1280, %v1281
        %v1298 = vmul.f32 %v1185, %v1185
        %v1299 = vmul.f32 %v1188, %v1188
        %v1300 = vmul.f32 %v1193, %v1193
        %v1301 = vmul.f32 %v1196, %v1196
        %v1302 = vmul.f32 %v1201, %v1201
        %v1303 = vmul.f32 %v1204, %v1204
        %v1304 = vmul.f32 %v1209, %v1209
        %v1305 = vmul.f32 %v1212, %v1212
        %v1306 = vmul.f32 %v1217, %v1217
        %v1307 = vmul.f32 %v1220, %v1220
        %v1308 = vmul.f32 %v1225, %v1225
        %v1309 = vmul.f32 %v1228, %v1228
        %v1310 = vmul.f32 %v1233, %v1233
        %v1311 = vmul.f32 %v1236, %v1236
        %v1312 = vmul.f32 %v1241, %v1241
        %v1313 = vmul.f32 %v1244, %v1244
        %1314 = vadd.xlane.f32.xlu0 %v1298
        %v1315 = vpop.xlane.xlu0 %1314
        %1316 = vadd.xlane.f32.xlu0 %v1299
        %v1317 = vpop.xlane.xlu0 %1316
        %1318 = vadd.xlane.f32.xlu0 %v1300
        %v1319 = vpop.xlane.xlu0 %1318
        %1320 = vadd.xlane.f32.xlu0 %v1301
        %v1321 = vpop.xlane.xlu0 %1320
        %1322 = vadd.xlane.f32.xlu0 %v1302
        %v1323 = vpop.xlane.xlu0 %1322
        %1324 = vadd.xlane.f32.xlu0 %v1303
        %v1325 = vpop.xlane.xlu0 %1324
        %1326 = vadd.xlane.f32.xlu0 %v1304
        %v1327 = vpop.xlane.xlu0 %1326
        %1328 = vadd.xlane.f32.xlu0 %v1305
        %v1329 = vpop.xlane.xlu0 %1328
        %1330 = vadd.xlane.f32.xlu0 %v1306
        %v1331 = vpop.xlane.xlu0 %1330
        %1332 = vadd.xlane.f32.xlu0 %v1307
        %v1333 = vpop.xlane.xlu0 %1332
        %1334 = vadd.xlane.f32.xlu0 %v1308
        %v1335 = vpop.xlane.xlu0 %1334
        %1336 = vadd.xlane.f32.xlu0 %v1309
        %v1337 = vpop.xlane.xlu0 %1336
        %1338 = vadd.xlane.f32.xlu0 %v1310
        %v1339 = vpop.xlane.xlu0 %1338
        %1340 = vadd.xlane.f32.xlu0 %v1311
        %v1341 = vpop.xlane.xlu0 %1340
        %1342 = vadd.xlane.f32.xlu0 %v1312
        %v1343 = vpop.xlane.xlu0 %1342
        %1344 = vadd.xlane.f32.xlu0 %v1313
        %v1345 = vpop.xlane.xlu0 %1344
        %v1346 = vmul.f32 %v1315, %v1281
        %v1347 = vmul.f32 %v1317, %v1281
        %v1348 = vmul.f32 %v1319, %v1281
        %v1349 = vmul.f32 %v1321, %v1281
        %v1350 = vmul.f32 %v1323, %v1281
        %v1351 = vmul.f32 %v1325, %v1281
        %v1352 = vmul.f32 %v1327, %v1281
        %v1353 = vmul.f32 %v1329, %v1281
        %v1354 = vmul.f32 %v1331, %v1281
        %v1355 = vmul.f32 %v1333, %v1281
        %v1356 = vmul.f32 %v1335, %v1281
        %v1357 = vmul.f32 %v1337, %v1281
        %v1358 = vmul.f32 %v1339, %v1281
        %v1359 = vmul.f32 %v1341, %v1281
        %v1360 = vmul.f32 %v1343, %v1281
        %v1361 = vmul.f32 %v1345, %v1281
        %v1362 = vmul.f32 %v1282, %v1282
        %v1363 = vmul.f32 %v1283, %v1283
        %v1364 = vmul.f32 %v1284, %v1284
        %v1365 = vmul.f32 %v1285, %v1285
        %v1366 = vmul.f32 %v1286, %v1286
        %v1367 = vmul.f32 %v1287, %v1287
        %v1368 = vmul.f32 %v1288, %v1288
        %v1369 = vmul.f32 %v1289, %v1289
        %v1370 = vmul.f32 %v1290, %v1290
        %v1371 = vmul.f32 %v1291, %v1291
        %v1372 = vmul.f32 %v1292, %v1292
        %v1373 = vmul.f32 %v1293, %v1293
        %v1374 = vmul.f32 %v1294, %v1294
        %v1375 = vmul.f32 %v1295, %v1295
        %v1376 = vmul.f32 %v1296, %v1296
        %v1377 = vmul.f32 %v1297, %v1297
        %v1378 = vsub.f32 %v1346, %v1362
        %v1379 = vsub.f32 %v1347, %v1363
        %v1380 = vsub.f32 %v1348, %v1364
        %v1381 = vsub.f32 %v1349, %v1365
        %v1382 = vsub.f32 %v1350, %v1366
        %v1383 = vsub.f32 %v1351, %v1367
        %v1384 = vsub.f32 %v1352, %v1368
        %v1385 = vsub.f32 %v1353, %v1369
        %v1386 = vsub.f32 %v1354, %v1370
        %v1387 = vsub.f32 %v1355, %v1371
        %v1388 = vsub.f32 %v1356, %v1372
        %v1389 = vsub.f32 %v1357, %v1373
        %v1390 = vsub.f32 %v1358, %v1374
        %v1391 = vsub.f32 %v1359, %v1375
        %v1392 = vsub.f32 %v1360, %v1376
        %v1393 = vsub.f32 %v1361, %v1377
        %v1394 = vmax.f32 %v1378, 0.0
        %v1395 = vmax.f32 %v1379, 0.0
        %v1396 = vmax.f32 %v1380, 0.0
        %v1397 = vmax.f32 %v1381, 0.0
        %v1398 = vmax.f32 %v1382, 0.0
        %v1399 = vmax.f32 %v1383, 0.0
        %v1400 = vmax.f32 %v1384, 0.0
        %v1401 = vmax.f32 %v1385, 0.0
        %v1402 = vmax.f32 %v1386, 0.0
        %v1403 = vmax.f32 %v1387, 0.0
        %v1404 = vmax.f32 %v1388, 0.0
        %v1405 = vmax.f32 %v1389, 0.0
        %v1406 = vmax.f32 %v1390, 0.0
        %v1407 = vmax.f32 %v1391, 0.0
        %v1408 = vmax.f32 %v1392, 0.0
        %v1409 = vmax.f32 %v1393, 0.0
        %v1410 = vadd.f32 %v1394, 1e-05
        %v1411 = vadd.f32 %v1395, 1e-05
        %v1412 = vadd.f32 %v1396, 1e-05
        %v1413 = vadd.f32 %v1397, 1e-05
        %v1414 = vadd.f32 %v1398, 1e-05
        %v1415 = vadd.f32 %v1399, 1e-05
        %v1416 = vadd.f32 %v1400, 1e-05
        %v1417 = vadd.f32 %v1401, 1e-05
        %v1418 = vadd.f32 %v1402, 1e-05
        %v1419 = vadd.f32 %v1403, 1e-05
        %v1420 = vadd.f32 %v1404, 1e-05
        %v1421 = vadd.f32 %v1405, 1e-05
        %v1422 = vadd.f32 %v1406, 1e-05
        %v1423 = vadd.f32 %v1407, 1e-05
        %v1424 = vadd.f32 %v1408, 1e-05
        %v1425 = vadd.f32 %v1409, 1e-05
        %v1426 = vrsqrt.pop %v1410
        %v1427 = vrsqrt.pop %v1411
        %v1428 = vrsqrt.pop %v1412
        %v1429 = vrsqrt.pop %v1413
        %v1430 = vrsqrt.pop %v1414
        %v1431 = vrsqrt.pop %v1415
        %v1432 = vrsqrt.pop %v1416
        %v1433 = vrsqrt.pop %v1417
        %v1434 = vrsqrt.pop %v1418
        %v1435 = vrsqrt.pop %v1419
        %v1436 = vrsqrt.pop %v1420
        %v1437 = vrsqrt.pop %v1421
        %v1438 = vrsqrt.pop %v1422
        %v1439 = vrsqrt.pop %v1423
        %v1440 = vrsqrt.pop %v1424
        %v1441 = vrsqrt.pop %v1425
        %v1442 = vmul.f32 %v1410, 0.5
        %v1443 = vmul.f32 %v1411, 0.5
        %v1444 = vmul.f32 %v1412, 0.5
        %v1445 = vmul.f32 %v1413, 0.5
        %v1446 = vmul.f32 %v1414, 0.5
        %v1447 = vmul.f32 %v1415, 0.5
        %v1448 = vmul.f32 %v1416, 0.5
        %v1449 = vmul.f32 %v1417, 0.5
        %v1450 = vmul.f32 %v1418, 0.5
        %v1451 = vmul.f32 %v1419, 0.5
        %v1452 = vmul.f32 %v1420, 0.5
        %v1453 = vmul.f32 %v1421, 0.5
        %v1454 = vmul.f32 %v1422, 0.5
        %v1455 = vmul.f32 %v1423, 0.5
        %v1456 = vmul.f32 %v1424, 0.5
        %v1457 = vmul.f32 %v1425, 0.5
        %v1458 = vmul.f32 %v1442, %v1426
        %v1459 = vmul.f32 %v1443, %v1427
        %v1460 = vmul.f32 %v1444, %v1428
        %v1461 = vmul.f32 %v1445, %v1429
        %v1462 = vmul.f32 %v1446, %v1430
        %v1463 = vmul.f32 %v1447, %v1431
        %v1464 = vmul.f32 %v1448, %v1432
        %v1465 = vmul.f32 %v1449, %v1433
        %v1466 = vmul.f32 %v1450, %v1434
        %v1467 = vmul.f32 %v1451, %v1435
        %v1468 = vmul.f32 %v1452, %v1436
        %v1469 = vmul.f32 %v1453, %v1437
        %v1470 = vmul.f32 %v1454, %v1438
        %v1471 = vmul.f32 %v1455, %v1439
        %v1472 = vmul.f32 %v1456, %v1440
        %v1473 = vmul.f32 %v1457, %v1441
        %v1474 = vmul.f32 %v1458, %v1426
        %v1475 = vmul.f32 %v1459, %v1427
        %v1476 = vmul.f32 %v1460, %v1428
        %v1477 = vmul.f32 %v1461, %v1429
        %v1478 = vmul.f32 %v1462, %v1430
        %v1479 = vmul.f32 %v1463, %v1431
        %v1480 = vmul.f32 %v1464, %v1432
        %v1481 = vmul.f32 %v1465, %v1433
        %v1482 = vmul.f32 %v1466, %v1434
        %v1483 = vmul.f32 %v1467, %v1435
        %v1484 = vmul.f32 %v1468, %v1436
        %v1485 = vmul.f32 %v1469, %v1437
        %v1486 = vmul.f32 %v1470, %v1438
        %v1487 = vmul.f32 %v1471, %v1439
        %v1488 = vmul.f32 %v1472, %v1440
        %v1489 = vmul.f32 %v1473, %v1441
        %v1490 = vsub.f32 1.5, %v1474
        %v1491 = vsub.f32 1.5, %v1475
        %v1492 = vsub.f32 1.5, %v1476
        %v1493 = vsub.f32 1.5, %v1477
        %v1494 = vsub.f32 1.5, %v1478
        %v1495 = vsub.f32 1.5, %v1479
        %v1496 = vsub.f32 1.5, %v1480
        %v1497 = vsub.f32 1.5, %v1481
        %v1498 = vsub.f32 1.5, %v1482
        %v1499 = vsub.f32 1.5, %v1483
        %v1500 = vsub.f32 1.5, %v1484
        %v1501 = vsub.f32 1.5, %v1485
        %v1502 = vsub.f32 1.5, %v1486
        %v1503 = vsub.f32 1.5, %v1487
        %v1504 = vsub.f32 1.5, %v1488
        %v1505 = vsub.f32 1.5, %v1489
        %v1506 = vmul.f32 %v1426, %v1490
        %v1507 = vmul.f32 %v1427, %v1491
        %v1508 = vmul.f32 %v1428, %v1492
        %v1509 = vmul.f32 %v1429, %v1493
        %v1510 = vmul.f32 %v1430, %v1494
        %v1511 = vmul.f32 %v1431, %v1495
        %v1512 = vmul.f32 %v1432, %v1496
        %v1513 = vmul.f32 %v1433, %v1497
        %v1514 = vmul.f32 %v1434, %v1498
        %v1515 = vmul.f32 %v1435, %v1499
        %v1516 = vmul.f32 %v1436, %v1500
        %v1517 = vmul.f32 %v1437, %v1501
        %v1518 = vmul.f32 %v1438, %v1502
        %v1519 = vmul.f32 %v1439, %v1503
        %v1520 = vmul.f32 %v1440, %v1504
        %v1521 = vmul.f32 %v1441, %v1505
        %v1522 = vsub.f32 %v1185, %v1282
        %v1523 = vsub.f32 %v1188, %v1283
        %v1524 = vsub.f32 %v1193, %v1284
        %v1525 = vsub.f32 %v1196, %v1285
        %v1526 = vsub.f32 %v1201, %v1286
        %v1527 = vsub.f32 %v1204, %v1287
        %v1528 = vsub.f32 %v1209, %v1288
        %v1529 = vsub.f32 %v1212, %v1289
        %v1530 = vsub.f32 %v1217, %v1290
        %v1531 = vsub.f32 %v1220, %v1291
        %v1532 = vsub.f32 %v1225, %v1292
        %v1533 = vsub.f32 %v1228, %v1293
        %v1534 = vsub.f32 %v1233, %v1294
        %v1535 = vsub.f32 %v1236, %v1295
        %v1536 = vsub.f32 %v1241, %v1296
        %v1537 = vsub.f32 %v1244, %v1297
        %v1538 = vmul.f32 %v1522, %v1506
        %v1539 = vmul.f32 %v1523, %v1507
        %v1540 = vmul.f32 %v1524, %v1508
        %v1541 = vmul.f32 %v1525, %v1509
        %v1542 = vmul.f32 %v1526, %v1510
        %v1543 = vmul.f32 %v1527, %v1511
        %v1544 = vmul.f32 %v1528, %v1512
        %v1545 = vmul.f32 %v1529, %v1513
        %v1546 = vmul.f32 %v1530, %v1514
        %v1547 = vmul.f32 %v1531, %v1515
        %v1548 = vmul.f32 %v1532, %v1516
        %v1549 = vmul.f32 %v1533, %v1517
        %v1550 = vmul.f32 %v1534, %v1518
        %v1551 = vmul.f32 %v1535, %v1519
        %v1552 = vmul.f32 %v1536, %v1520
        %v1553 = vmul.f32 %v1537, %v1521
        %v1555 = vlaneseq
        %v1556 = vshrl.u32 %v1555, 7
        %v1557 = vsub.s32 0, %v1556
        %v1558 = vrot.slane %v1247, %v1557
        %v1560 = vmul.f32 %v1538, %v1558
        %v1561 = vmul.f32 %v1539, %v1558
        %v1562 = vmul.f32 %v1540, %v1558
        %v1563 = vmul.f32 %v1541, %v1558
        %v1564 = vmul.f32 %v1542, %v1558
        %v1565 = vmul.f32 %v1543, %v1558
        %v1566 = vmul.f32 %v1544, %v1558
        %v1567 = vmul.f32 %v1545, %v1558
        %v1568 = vmul.f32 %v1546, %v1558
        %v1569 = vmul.f32 %v1547, %v1558
        %v1570 = vmul.f32 %v1548, %v1558
        %v1571 = vmul.f32 %v1549, %v1558
        %v1572 = vmul.f32 %v1550, %v1558
        %v1573 = vmul.f32 %v1551, %v1558
        %v1574 = vmul.f32 %v1552, %v1558
        %v1575 = vmul.f32 %v1553, %v1558
        %v1577 = vlaneseq
        %v1578 = vshrl.u32 %v1577, 7
        %v1579 = vsub.s32 0, %v1578
        %v1580 = vrot.slane %v1248, %v1579
        %v1582 = vadd.f32 %v1560, %v1580
        %v1583 = vadd.f32 %v1561, %v1580
        %v1584 = vadd.f32 %v1562, %v1580
        %v1585 = vadd.f32 %v1563, %v1580
        %v1586 = vadd.f32 %v1564, %v1580
        %v1587 = vadd.f32 %v1565, %v1580
        %v1588 = vadd.f32 %v1566, %v1580
        %v1589 = vadd.f32 %v1567, %v1580
        %v1590 = vadd.f32 %v1568, %v1580
        %v1591 = vadd.f32 %v1569, %v1580
        %v1592 = vadd.f32 %v1570, %v1580
        %v1593 = vadd.f32 %v1571, %v1580
        %v1594 = vadd.f32 %v1572, %v1580
        %v1595 = vadd.f32 %v1573, %v1580
        %v1596 = vadd.f32 %v1574, %v1580
        %v1597 = vadd.f32 %v1575, %v1580
        %v1598 = vmax.f32 %v1582, 0.0
        %v1599 = vmax.f32 %v1583, 0.0
        %v1600 = vmax.f32 %v1584, 0.0
        %v1601 = vmax.f32 %v1585, 0.0
        %v1602 = vmax.f32 %v1586, 0.0
        %v1603 = vmax.f32 %v1587, 0.0
        %v1604 = vmax.f32 %v1588, 0.0
        %v1605 = vmax.f32 %v1589, 0.0
        %v1606 = vmax.f32 %v1590, 0.0
        %v1607 = vmax.f32 %v1591, 0.0
        %v1608 = vmax.f32 %v1592, 0.0
        %v1609 = vmax.f32 %v1593, 0.0
        %v1610 = vmax.f32 %v1594, 0.0
        %v1611 = vmax.f32 %v1595, 0.0
        %v1612 = vmax.f32 %v1596, 0.0
        %v1613 = vmax.f32 %v1597, 0.0
        %v1614 = vpack.c.bf16 %v1599, %v1598
        %v1615 = vpack.c.bf16 %v1601, %v1600
        %v1616 = vpack.c.bf16 %v1603, %v1602
        %v1617 = vpack.c.bf16 %v1605, %v1604
        %v1618 = vpack.c.bf16 %v1607, %v1606
        %v1619 = vpack.c.bf16 %v1609, %v1608
        %v1620 = vpack.c.bf16 %v1611, %v1610
        %v1621 = vpack.c.bf16 %v1613, %v1612
        %v1622 = vld [vmem:[%s7] sm:$0xf]
        %v1623 = vld [vmem:[%s7 + $0x4] sm:$0xf]
        %v1624 = vld [vmem:[%s7 + $0x8] sm:$0xf]
        %v1625 = vld [vmem:[%s7 + $0xc] sm:$0xf]
        %v1626 = vld [vmem:[%s7 + $0x10] sm:$0xf]
        %v1627 = vld [vmem:[%s7 + $0x14] sm:$0xf]
        %v1628 = vld [vmem:[%s7 + $0x18] sm:$0xf]
        %v1629 = vld [vmem:[%s7 + $0x1c] sm:$0xf]
        %v1630 = vld [vmem:[%s7 + $0x20] sm:$0xf]
        %v1631 = vld [vmem:[%s7 + $0x24] sm:$0xf]
        %v1632 = vld [vmem:[%s7 + $0x28] sm:$0xf]
        %v1633 = vld [vmem:[%s7 + $0x2c] sm:$0xf]
        %v1634 = vld [vmem:[%s7 + $0x30] sm:$0xf]
        %v1635 = vld [vmem:[%s7 + $0x34] sm:$0xf]
        %v1636 = vld [vmem:[%s7 + $0x38] sm:$0xf]
        %v1637 = vld [vmem:[%s7 + $0x3c] sm:$0xf]
        %v1638 = vld [vmem:[%s8] sm:$0x1]
        %v1640 = vlaneseq
        %v1641 = vshrl.u32 %v1640, 7
        %v1642 = vsub.s32 0, %v1641
        %v1643 = vrot.slane %v1638, %v1642
        %v1661 = vunpack.c.l.b16 %v1622
        %v1662 = vunpack.c.l.b16 %v1623
        %v1663 = vunpack.c.l.b16 %v1624
        %v1664 = vunpack.c.l.b16 %v1625
        %v1665 = vunpack.c.l.b16 %v1626
        %v1666 = vunpack.c.l.b16 %v1627
        %v1667 = vunpack.c.l.b16 %v1628
        %v1668 = vunpack.c.l.b16 %v1629
        %v1669 = vunpack.c.l.b16 %v1630
        %v1670 = vunpack.c.l.b16 %v1631
        %v1671 = vunpack.c.l.b16 %v1632
        %v1672 = vunpack.c.l.b16 %v1633
        %v1673 = vunpack.c.l.b16 %v1634
        %v1674 = vunpack.c.l.b16 %v1635
        %v1675 = vunpack.c.l.b16 %v1636
        %v1676 = vunpack.c.l.b16 %v1637
        %v1677 = vpack.c.b16 %v1662, %v1661
        %v1678 = vpack.c.b16 %v1664, %v1663
        %v1679 = vpack.c.b16 %v1666, %v1665
        %v1680 = vpack.c.b16 %v1668, %v1667
        %v1681 = vpack.c.b16 %v1670, %v1669
        %v1682 = vpack.c.b16 %v1672, %v1671
        %v1683 = vpack.c.b16 %v1674, %v1673
        %v1684 = vpack.c.b16 %v1676, %v1675
        %1693 = vmatprep.subr.bf16.mxu0 0
        %1694 = vmatpush1.bf16.msra.mxu0 %v1684
        %1695 = vmatprep.subr.bf16.mxu0 0
        %1696 = vmatpush1.bf16.msra.mxu0 %v1683
        %1697 = vmatprep.subr.bf16.mxu0 0
        %1698 = vmatpush1.bf16.msra.mxu0 %v1682
        %1699 = vmatprep.subr.bf16.mxu0 0
        %1700 = vmatpush1.bf16.msra.mxu0 %v1681
        %1701 = vmatprep.subr.bf16.mxu0 0
        %1702 = vmatpush1.bf16.msra.mxu0 %v1680
        %1703 = vmatprep.subr.bf16.mxu0 0
        %1704 = vmatpush1.bf16.msra.mxu0 %v1679
        %1705 = vmatprep.subr.bf16.mxu0 0
        %1706 = vmatpush1.bf16.msra.mxu0 %v1678
        %1707 = vmatprep.subr.bf16.mxu0 0
        %1708 = vmatpush1.bf16.msra.mxu0 %v1677
        %1709 = vmatprep.subr.bf16.mxu0 0
        %1710 = vmatpush2.bf16.msra.mxu0 0
        %1711 = vmatprep.subr.bf16.mxu0 0
        %1712 = vmatpush2.bf16.msra.mxu0 0
        %1713 = vmatprep.subr.bf16.mxu0 0
        %1714 = vmatpush2.bf16.msra.mxu0 0
        %1715 = vmatprep.subr.bf16.mxu0 0
        %1716 = vmatpush2.bf16.msra.mxu0 0
        %1717 = vmatprep.subr.bf16.mxu0 0
        %1718 = vmatpush2.bf16.msra.mxu0 0
        %1719 = vmatprep.subr.bf16.mxu0 0
        %1720 = vmatpush2.bf16.msra.mxu0 0
        %1721 = vmatprep.subr.bf16.mxu0 0
        %1722 = vmatpush2.bf16.msra.mxu0 0
        %1723 = vmatprep.subr.bf16.mxu0 0
        %1724 = vmatpush2.bf16.msra.mxu0 0
        %1725 = vmatprep.mubr.bf16.mxu0 0
        %1726 = vmatmul.mubr.bf16.gmra.mxu0 %v1614
        %v1727 = vpop.f32.mrf.mxu0
        %v1728 = vadd.f32 %v1643, %v1727
        %v1729 = vpop.f32.mrf.mxu0
        %v1730 = vpop.f32.mrf.mxu0
        %v1731 = vadd.f32 %v1643, %v1730
        %v1732 = vpop.f32.mrf.mxu0
        %1733 = vmatprep.mubr.bf16.mxu0 0
        %1734 = vmatmul.mubr.bf16.gmra.mxu0 %v1615
        %v1735 = vpop.f32.mrf.mxu0
        %v1736 = vadd.f32 %v1643, %v1735
        %v1737 = vpop.f32.mrf.mxu0
        %v1738 = vpop.f32.mrf.mxu0
        %v1739 = vadd.f32 %v1643, %v1738
        %v1740 = vpop.f32.mrf.mxu0
        %1741 = vmatprep.mubr.bf16.mxu0 0
        %1742 = vmatmul.mubr.bf16.gmra.mxu0 %v1616
        %v1743 = vpop.f32.mrf.mxu0
        %v1744 = vadd.f32 %v1643, %v1743
        %v1745 = vpop.f32.mrf.mxu0
        %v1746 = vpop.f32.mrf.mxu0
        %v1747 = vadd.f32 %v1643, %v1746
        %v1748 = vpop.f32.mrf.mxu0
        %1749 = vmatprep.mubr.bf16.mxu0 0
        %1750 = vmatmul.mubr.bf16.gmra.mxu0 %v1617
        %v1751 = vpop.f32.mrf.mxu0
        %v1752 = vadd.f32 %v1643, %v1751
        %v1753 = vpop.f32.mrf.mxu0
        %v1754 = vpop.f32.mrf.mxu0
        %v1755 = vadd.f32 %v1643, %v1754
        %v1756 = vpop.f32.mrf.mxu0
        %1757 = vmatprep.mubr.bf16.mxu0 0
        %1758 = vmatmul.mubr.bf16.gmra.mxu0 %v1618
        %v1759 = vpop.f32.mrf.mxu0
        %v1760 = vadd.f32 %v1643, %v1759
        %v1761 = vpop.f32.mrf.mxu0
        %v1762 = vpop.f32.mrf.mxu0
        %v1763 = vadd.f32 %v1643, %v1762
        %v1764 = vpop.f32.mrf.mxu0
        %1765 = vmatprep.mubr.bf16.mxu0 0
        %1766 = vmatmul.mubr.bf16.gmra.mxu0 %v1619
        %v1767 = vpop.f32.mrf.mxu0
        %v1768 = vadd.f32 %v1643, %v1767
        %v1769 = vpop.f32.mrf.mxu0
        %v1770 = vpop.f32.mrf.mxu0
        %v1771 = vadd.f32 %v1643, %v1770
        %v1772 = vpop.f32.mrf.mxu0
        %1773 = vmatprep.mubr.bf16.mxu0 0
        %1774 = vmatmul.mubr.bf16.gmra.mxu0 %v1620
        %v1775 = vpop.f32.mrf.mxu0
        %v1776 = vadd.f32 %v1643, %v1775
        %v1777 = vpop.f32.mrf.mxu0
        %v1778 = vpop.f32.mrf.mxu0
        %v1779 = vadd.f32 %v1643, %v1778
        %v1780 = vpop.f32.mrf.mxu0
        %1781 = vmatprep.mubr.bf16.mxu0 0
        %1782 = vmatmul.mubr.bf16.gmra.mxu0 %v1621
        %v1783 = vpop.f32.mrf.mxu0
        %v1784 = vadd.f32 %v1643, %v1783
        %v1785 = vpop.f32.mrf.mxu0
        %v1786 = vpop.f32.mrf.mxu0
        %v1787 = vadd.f32 %v1643, %v1786
        %v1788 = vpop.f32.mrf.mxu0
        %1789 = vdwg.mxu0
        %v1790 = vld [vmem:[%s9] sm:$0x1]
        %v1791 = vld [vmem:[%s10] sm:$0x1]
        %vm1792 = vcmask 523264
        %v1793 = vsel %vm1792, %v1728, 0.0
        %1794 = vadd.xlane.f32.xlu0 %v1793
        %v1795 = vpop.xlane.xlu0 %1794
        %v1796 = vsel %vm1792, %v1731, 0.0
        %1797 = vadd.xlane.f32.xlu0 %v1796
        %v1798 = vpop.xlane.xlu0 %1797
        %v1799 = vsel %vm1792, %v1736, 0.0
        %1800 = vadd.xlane.f32.xlu0 %v1799
        %v1801 = vpop.xlane.xlu0 %1800
        %v1802 = vsel %vm1792, %v1739, 0.0
        %1803 = vadd.xlane.f32.xlu0 %v1802
        %v1804 = vpop.xlane.xlu0 %1803
        %v1805 = vsel %vm1792, %v1744, 0.0
        %1806 = vadd.xlane.f32.xlu0 %v1805
        %v1807 = vpop.xlane.xlu0 %1806
        %v1808 = vsel %vm1792, %v1747, 0.0
        %1809 = vadd.xlane.f32.xlu0 %v1808
        %v1810 = vpop.xlane.xlu0 %1809
        %v1811 = vsel %vm1792, %v1752, 0.0
        %1812 = vadd.xlane.f32.xlu0 %v1811
        %v1813 = vpop.xlane.xlu0 %1812
        %v1814 = vsel %vm1792, %v1755, 0.0
        %1815 = vadd.xlane.f32.xlu0 %v1814
        %v1816 = vpop.xlane.xlu0 %1815
        %v1817 = vsel %vm1792, %v1760, 0.0
        %1818 = vadd.xlane.f32.xlu0 %v1817
        %v1819 = vpop.xlane.xlu0 %1818
        %v1820 = vsel %vm1792, %v1763, 0.0
        %1821 = vadd.xlane.f32.xlu0 %v1820
        %v1822 = vpop.xlane.xlu0 %1821
        %v1823 = vsel %vm1792, %v1768, 0.0
        %1824 = vadd.xlane.f32.xlu0 %v1823
        %v1825 = vpop.xlane.xlu0 %1824
        %v1826 = vsel %vm1792, %v1771, 0.0
        %1827 = vadd.xlane.f32.xlu0 %v1826
        %v1828 = vpop.xlane.xlu0 %1827
        %v1829 = vsel %vm1792, %v1776, 0.0
        %1830 = vadd.xlane.f32.xlu0 %v1829
        %v1831 = vpop.xlane.xlu0 %1830
        %v1832 = vsel %vm1792, %v1779, 0.0
        %1833 = vadd.xlane.f32.xlu0 %v1832
        %v1834 = vpop.xlane.xlu0 %1833
        %v1835 = vsel %vm1792, %v1784, 0.0
        %1836 = vadd.xlane.f32.xlu0 %v1835
        %v1837 = vpop.xlane.xlu0 %1836
        %v1838 = vsel %vm1792, %v1787, 0.0
        %1839 = vadd.xlane.f32.xlu0 %v1838
        %v1840 = vpop.xlane.xlu0 %1839
        %v1841 = vrcp.pop 64.0
        %v1842 = vmul.f32 %v1795, %v1841
        %v1843 = vmul.f32 %v1798, %v1841
        %v1844 = vmul.f32 %v1801, %v1841
        %v1845 = vmul.f32 %v1804, %v1841
        %v1846 = vmul.f32 %v1807, %v1841
        %v1847 = vmul.f32 %v1810, %v1841
        %v1848 = vmul.f32 %v1813, %v1841
        %v1849 = vmul.f32 %v1816, %v1841
        %v1850 = vmul.f32 %v1819, %v1841
        %v1851 = vmul.f32 %v1822, %v1841
        %v1852 = vmul.f32 %v1825, %v1841
        %v1853 = vmul.f32 %v1828, %v1841
        %v1854 = vmul.f32 %v1831, %v1841
        %v1855 = vmul.f32 %v1834, %v1841
        %v1856 = vmul.f32 %v1837, %v1841
        %v1857 = vmul.f32 %v1840, %v1841
        %v1858 = vmul.f32 %v1728, %v1728
        %v1859 = vmul.f32 %v1731, %v1731
        %v1860 = vmul.f32 %v1736, %v1736
        %v1861 = vmul.f32 %v1739, %v1739
        %v1862 = vmul.f32 %v1744, %v1744
        %v1863 = vmul.f32 %v1747, %v1747
        %v1864 = vmul.f32 %v1752, %v1752
        %v1865 = vmul.f32 %v1755, %v1755
        %v1866 = vmul.f32 %v1760, %v1760
        %v1867 = vmul.f32 %v1763, %v1763
        %v1868 = vmul.f32 %v1768, %v1768
        %v1869 = vmul.f32 %v1771, %v1771
        %v1870 = vmul.f32 %v1776, %v1776
        %v1871 = vmul.f32 %v1779, %v1779
        %v1872 = vmul.f32 %v1784, %v1784
        %v1873 = vmul.f32 %v1787, %v1787
        %v1874 = vsel %vm1792, %v1858, 0.0
        %1875 = vadd.xlane.f32.xlu0 %v1874
        %v1876 = vpop.xlane.xlu0 %1875
        %v1877 = vsel %vm1792, %v1859, 0.0
        %1878 = vadd.xlane.f32.xlu0 %v1877
        %v1879 = vpop.xlane.xlu0 %1878
        %v1880 = vsel %vm1792, %v1860, 0.0
        %1881 = vadd.xlane.f32.xlu0 %v1880
        %v1882 = vpop.xlane.xlu0 %1881
        %v1883 = vsel %vm1792, %v1861, 0.0
        %1884 = vadd.xlane.f32.xlu0 %v1883
        %v1885 = vpop.xlane.xlu0 %1884
        %v1886 = vsel %vm1792, %v1862, 0.0
        %1887 = vadd.xlane.f32.xlu0 %v1886
        %v1888 = vpop.xlane.xlu0 %1887
        %v1889 = vsel %vm1792, %v1863, 0.0
        %1890 = vadd.xlane.f32.xlu0 %v1889
        %v1891 = vpop.xlane.xlu0 %1890
        %v1892 = vsel %vm1792, %v1864, 0.0
        %1893 = vadd.xlane.f32.xlu0 %v1892
        %v1894 = vpop.xlane.xlu0 %1893
        %v1895 = vsel %vm1792, %v1865, 0.0
        %1896 = vadd.xlane.f32.xlu0 %v1895
        %v1897 = vpop.xlane.xlu0 %1896
        %v1898 = vsel %vm1792, %v1866, 0.0
        %1899 = vadd.xlane.f32.xlu0 %v1898
        %v1900 = vpop.xlane.xlu0 %1899
        %v1901 = vsel %vm1792, %v1867, 0.0
        %1902 = vadd.xlane.f32.xlu0 %v1901
        %v1903 = vpop.xlane.xlu0 %1902
        %v1904 = vsel %vm1792, %v1868, 0.0
        %1905 = vadd.xlane.f32.xlu0 %v1904
        %v1906 = vpop.xlane.xlu0 %1905
        %v1907 = vsel %vm1792, %v1869, 0.0
        %1908 = vadd.xlane.f32.xlu0 %v1907
        %v1909 = vpop.xlane.xlu0 %1908
        %v1910 = vsel %vm1792, %v1870, 0.0
        %1911 = vadd.xlane.f32.xlu0 %v1910
        %v1912 = vpop.xlane.xlu0 %1911
        %v1913 = vsel %vm1792, %v1871, 0.0
        %1914 = vadd.xlane.f32.xlu0 %v1913
        %v1915 = vpop.xlane.xlu0 %1914
        %v1916 = vsel %vm1792, %v1872, 0.0
        %1917 = vadd.xlane.f32.xlu0 %v1916
        %v1918 = vpop.xlane.xlu0 %1917
        %v1919 = vsel %vm1792, %v1873, 0.0
        %1920 = vadd.xlane.f32.xlu0 %v1919
        %v1921 = vpop.xlane.xlu0 %1920
        %v1922 = vmul.f32 %v1876, %v1841
        %v1923 = vmul.f32 %v1879, %v1841
        %v1924 = vmul.f32 %v1882, %v1841
        %v1925 = vmul.f32 %v1885, %v1841
        %v1926 = vmul.f32 %v1888, %v1841
        %v1927 = vmul.f32 %v1891, %v1841
        %v1928 = vmul.f32 %v1894, %v1841
        %v1929 = vmul.f32 %v1897, %v1841
        %v1930 = vmul.f32 %v1900, %v1841
        %v1931 = vmul.f32 %v1903, %v1841
        %v1932 = vmul.f32 %v1906, %v1841
        %v1933 = vmul.f32 %v1909, %v1841
        %v1934 = vmul.f32 %v1912, %v1841
        %v1935 = vmul.f32 %v1915, %v1841
        %v1936 = vmul.f32 %v1918, %v1841
        %v1937 = vmul.f32 %v1921, %v1841
        %v1938 = vmul.f32 %v1842, %v1842
        %v1939 = vmul.f32 %v1843, %v1843
        %v1940 = vmul.f32 %v1844, %v1844
        %v1941 = vmul.f32 %v1845, %v1845
        %v1942 = vmul.f32 %v1846, %v1846
        %v1943 = vmul.f32 %v1847, %v1847
        %v1944 = vmul.f32 %v1848, %v1848
        %v1945 = vmul.f32 %v1849, %v1849
        %v1946 = vmul.f32 %v1850, %v1850
        %v1947 = vmul.f32 %v1851, %v1851
        %v1948 = vmul.f32 %v1852, %v1852
        %v1949 = vmul.f32 %v1853, %v1853
        %v1950 = vmul.f32 %v1854, %v1854
        %v1951 = vmul.f32 %v1855, %v1855
        %v1952 = vmul.f32 %v1856, %v1856
        %v1953 = vmul.f32 %v1857, %v1857
        %v1954 = vsub.f32 %v1922, %v1938
        %v1955 = vsub.f32 %v1923, %v1939
        %v1956 = vsub.f32 %v1924, %v1940
        %v1957 = vsub.f32 %v1925, %v1941
        %v1958 = vsub.f32 %v1926, %v1942
        %v1959 = vsub.f32 %v1927, %v1943
        %v1960 = vsub.f32 %v1928, %v1944
        %v1961 = vsub.f32 %v1929, %v1945
        %v1962 = vsub.f32 %v1930, %v1946
        %v1963 = vsub.f32 %v1931, %v1947
        %v1964 = vsub.f32 %v1932, %v1948
        %v1965 = vsub.f32 %v1933, %v1949
        %v1966 = vsub.f32 %v1934, %v1950
        %v1967 = vsub.f32 %v1935, %v1951
        %v1968 = vsub.f32 %v1936, %v1952
        %v1969 = vsub.f32 %v1937, %v1953
        %v1970 = vmax.f32 %v1954, 0.0
        %v1971 = vmax.f32 %v1955, 0.0
        %v1972 = vmax.f32 %v1956, 0.0
        %v1973 = vmax.f32 %v1957, 0.0
        %v1974 = vmax.f32 %v1958, 0.0
        %v1975 = vmax.f32 %v1959, 0.0
        %v1976 = vmax.f32 %v1960, 0.0
        %v1977 = vmax.f32 %v1961, 0.0
        %v1978 = vmax.f32 %v1962, 0.0
        %v1979 = vmax.f32 %v1963, 0.0
        %v1980 = vmax.f32 %v1964, 0.0
        %v1981 = vmax.f32 %v1965, 0.0
        %v1982 = vmax.f32 %v1966, 0.0
        %v1983 = vmax.f32 %v1967, 0.0
        %v1984 = vmax.f32 %v1968, 0.0
        %v1985 = vmax.f32 %v1969, 0.0
        %v1986 = vadd.f32 %v1970, 1e-05
        %v1987 = vadd.f32 %v1971, 1e-05
        %v1988 = vadd.f32 %v1972, 1e-05
        %v1989 = vadd.f32 %v1973, 1e-05
        %v1990 = vadd.f32 %v1974, 1e-05
        %v1991 = vadd.f32 %v1975, 1e-05
        %v1992 = vadd.f32 %v1976, 1e-05
        %v1993 = vadd.f32 %v1977, 1e-05
        %v1994 = vadd.f32 %v1978, 1e-05
        %v1995 = vadd.f32 %v1979, 1e-05
        %v1996 = vadd.f32 %v1980, 1e-05
        %v1997 = vadd.f32 %v1981, 1e-05
        %v1998 = vadd.f32 %v1982, 1e-05
        %v1999 = vadd.f32 %v1983, 1e-05
        %v2000 = vadd.f32 %v1984, 1e-05
        %v2001 = vadd.f32 %v1985, 1e-05
        %v2002 = vrsqrt.pop %v1986
        %v2003 = vrsqrt.pop %v1987
        %v2004 = vrsqrt.pop %v1988
        %v2005 = vrsqrt.pop %v1989
        %v2006 = vrsqrt.pop %v1990
        %v2007 = vrsqrt.pop %v1991
        %v2008 = vrsqrt.pop %v1992
        %v2009 = vrsqrt.pop %v1993
        %v2010 = vrsqrt.pop %v1994
        %v2011 = vrsqrt.pop %v1995
        %v2012 = vrsqrt.pop %v1996
        %v2013 = vrsqrt.pop %v1997
        %v2014 = vrsqrt.pop %v1998
        %v2015 = vrsqrt.pop %v1999
        %v2016 = vrsqrt.pop %v2000
        %v2017 = vrsqrt.pop %v2001
        %v2018 = vmul.f32 %v1986, 0.5
        %v2019 = vmul.f32 %v1987, 0.5
        %v2020 = vmul.f32 %v1988, 0.5
        %v2021 = vmul.f32 %v1989, 0.5
        %v2022 = vmul.f32 %v1990, 0.5
        %v2023 = vmul.f32 %v1991, 0.5
        %v2024 = vmul.f32 %v1992, 0.5
        %v2025 = vmul.f32 %v1993, 0.5
        %v2026 = vmul.f32 %v1994, 0.5
        %v2027 = vmul.f32 %v1995, 0.5
        %v2028 = vmul.f32 %v1996, 0.5
        %v2029 = vmul.f32 %v1997, 0.5
        %v2030 = vmul.f32 %v1998, 0.5
        %v2031 = vmul.f32 %v1999, 0.5
        %v2032 = vmul.f32 %v2000, 0.5
        %v2033 = vmul.f32 %v2001, 0.5
        %v2034 = vmul.f32 %v2018, %v2002
        %v2035 = vmul.f32 %v2019, %v2003
        %v2036 = vmul.f32 %v2020, %v2004
        %v2037 = vmul.f32 %v2021, %v2005
        %v2038 = vmul.f32 %v2022, %v2006
        %v2039 = vmul.f32 %v2023, %v2007
        %v2040 = vmul.f32 %v2024, %v2008
        %v2041 = vmul.f32 %v2025, %v2009
        %v2042 = vmul.f32 %v2026, %v2010
        %v2043 = vmul.f32 %v2027, %v2011
        %v2044 = vmul.f32 %v2028, %v2012
        %v2045 = vmul.f32 %v2029, %v2013
        %v2046 = vmul.f32 %v2030, %v2014
        %v2047 = vmul.f32 %v2031, %v2015
        %v2048 = vmul.f32 %v2032, %v2016
        %v2049 = vmul.f32 %v2033, %v2017
        %v2050 = vmul.f32 %v2034, %v2002
        %v2051 = vmul.f32 %v2035, %v2003
        %v2052 = vmul.f32 %v2036, %v2004
        %v2053 = vmul.f32 %v2037, %v2005
        %v2054 = vmul.f32 %v2038, %v2006
        %v2055 = vmul.f32 %v2039, %v2007
        %v2056 = vmul.f32 %v2040, %v2008
        %v2057 = vmul.f32 %v2041, %v2009
        %v2058 = vmul.f32 %v2042, %v2010
        %v2059 = vmul.f32 %v2043, %v2011
        %v2060 = vmul.f32 %v2044, %v2012
        %v2061 = vmul.f32 %v2045, %v2013
        %v2062 = vmul.f32 %v2046, %v2014
        %v2063 = vmul.f32 %v2047, %v2015
        %v2064 = vmul.f32 %v2048, %v2016
        %v2065 = vmul.f32 %v2049, %v2017
        %v2066 = vsub.f32 1.5, %v2050
        %v2067 = vsub.f32 1.5, %v2051
        %v2068 = vsub.f32 1.5, %v2052
        %v2069 = vsub.f32 1.5, %v2053
        %v2070 = vsub.f32 1.5, %v2054
        %v2071 = vsub.f32 1.5, %v2055
        %v2072 = vsub.f32 1.5, %v2056
        %v2073 = vsub.f32 1.5, %v2057
        %v2074 = vsub.f32 1.5, %v2058
        %v2075 = vsub.f32 1.5, %v2059
        %v2076 = vsub.f32 1.5, %v2060
        %v2077 = vsub.f32 1.5, %v2061
        %v2078 = vsub.f32 1.5, %v2062
        %v2079 = vsub.f32 1.5, %v2063
        %v2080 = vsub.f32 1.5, %v2064
        %v2081 = vsub.f32 1.5, %v2065
        %v2082 = vmul.f32 %v2002, %v2066
        %v2083 = vmul.f32 %v2003, %v2067
        %v2084 = vmul.f32 %v2004, %v2068
        %v2085 = vmul.f32 %v2005, %v2069
        %v2086 = vmul.f32 %v2006, %v2070
        %v2087 = vmul.f32 %v2007, %v2071
        %v2088 = vmul.f32 %v2008, %v2072
        %v2089 = vmul.f32 %v2009, %v2073
        %v2090 = vmul.f32 %v2010, %v2074
        %v2091 = vmul.f32 %v2011, %v2075
        %v2092 = vmul.f32 %v2012, %v2076
        %v2093 = vmul.f32 %v2013, %v2077
        %v2094 = vmul.f32 %v2014, %v2078
        %v2095 = vmul.f32 %v2015, %v2079
        %v2096 = vmul.f32 %v2016, %v2080
        %v2097 = vmul.f32 %v2017, %v2081
        %v2098 = vsub.f32 %v1728, %v1842
        %v2099 = vsub.f32 %v1731, %v1843
        %v2100 = vsub.f32 %v1736, %v1844
        %v2101 = vsub.f32 %v1739, %v1845
        %v2102 = vsub.f32 %v1744, %v1846
        %v2103 = vsub.f32 %v1747, %v1847
        %v2104 = vsub.f32 %v1752, %v1848
        %v2105 = vsub.f32 %v1755, %v1849
        %v2106 = vsub.f32 %v1760, %v1850
        %v2107 = vsub.f32 %v1763, %v1851
        %v2108 = vsub.f32 %v1768, %v1852
        %v2109 = vsub.f32 %v1771, %v1853
        %v2110 = vsub.f32 %v1776, %v1854
        %v2111 = vsub.f32 %v1779, %v1855
        %v2112 = vsub.f32 %v1784, %v1856
        %v2113 = vsub.f32 %v1787, %v1857
        %v2114 = vmul.f32 %v2098, %v2082
        %v2115 = vmul.f32 %v2099, %v2083
        %v2116 = vmul.f32 %v2100, %v2084
        %v2117 = vmul.f32 %v2101, %v2085
        %v2118 = vmul.f32 %v2102, %v2086
        %v2119 = vmul.f32 %v2103, %v2087
        %v2120 = vmul.f32 %v2104, %v2088
        %v2121 = vmul.f32 %v2105, %v2089
        %v2122 = vmul.f32 %v2106, %v2090
        %v2123 = vmul.f32 %v2107, %v2091
        %v2124 = vmul.f32 %v2108, %v2092
        %v2125 = vmul.f32 %v2109, %v2093
        %v2126 = vmul.f32 %v2110, %v2094
        %v2127 = vmul.f32 %v2111, %v2095
        %v2128 = vmul.f32 %v2112, %v2096
        %v2129 = vmul.f32 %v2113, %v2097
        %v2131 = vlaneseq
        %v2132 = vshrl.u32 %v2131, 7
        %v2133 = vsub.s32 0, %v2132
        %v2134 = vrot.slane %v1790, %v2133
        %v2136 = vmul.f32 %v2114, %v2134
        %v2137 = vmul.f32 %v2115, %v2134
        %v2138 = vmul.f32 %v2116, %v2134
        %v2139 = vmul.f32 %v2117, %v2134
        %v2140 = vmul.f32 %v2118, %v2134
        %v2141 = vmul.f32 %v2119, %v2134
        %v2142 = vmul.f32 %v2120, %v2134
        %v2143 = vmul.f32 %v2121, %v2134
        %v2144 = vmul.f32 %v2122, %v2134
        %v2145 = vmul.f32 %v2123, %v2134
        %v2146 = vmul.f32 %v2124, %v2134
        %v2147 = vmul.f32 %v2125, %v2134
        %v2148 = vmul.f32 %v2126, %v2134
        %v2149 = vmul.f32 %v2127, %v2134
        %v2150 = vmul.f32 %v2128, %v2134
        %v2151 = vmul.f32 %v2129, %v2134
        %v2153 = vlaneseq
        %v2154 = vshrl.u32 %v2153, 7
        %v2155 = vsub.s32 0, %v2154
        %v2156 = vrot.slane %v1791, %v2155
        %v2158 = vadd.f32 %v2136, %v2156
        %v2159 = vadd.f32 %v2137, %v2156
        %v2160 = vadd.f32 %v2138, %v2156
        %v2161 = vadd.f32 %v2139, %v2156
        %v2162 = vadd.f32 %v2140, %v2156
        %v2163 = vadd.f32 %v2141, %v2156
        %v2164 = vadd.f32 %v2142, %v2156
        %v2165 = vadd.f32 %v2143, %v2156
        %v2166 = vadd.f32 %v2144, %v2156
        %v2167 = vadd.f32 %v2145, %v2156
        %v2168 = vadd.f32 %v2146, %v2156
        %v2169 = vadd.f32 %v2147, %v2156
        %v2170 = vadd.f32 %v2148, %v2156
        %v2171 = vadd.f32 %v2149, %v2156
        %v2172 = vadd.f32 %v2150, %v2156
        %v2173 = vadd.f32 %v2151, %v2156
        %v2174 = vmax.f32 %v2158, 0.0
        %v2175 = vmax.f32 %v2159, 0.0
        %v2176 = vmax.f32 %v2160, 0.0
        %v2177 = vmax.f32 %v2161, 0.0
        %v2178 = vmax.f32 %v2162, 0.0
        %v2179 = vmax.f32 %v2163, 0.0
        %v2180 = vmax.f32 %v2164, 0.0
        %v2181 = vmax.f32 %v2165, 0.0
        %v2182 = vmax.f32 %v2166, 0.0
        %v2183 = vmax.f32 %v2167, 0.0
        %v2184 = vmax.f32 %v2168, 0.0
        %v2185 = vmax.f32 %v2169, 0.0
        %v2186 = vmax.f32 %v2170, 0.0
        %v2187 = vmax.f32 %v2171, 0.0
        %v2188 = vmax.f32 %v2172, 0.0
        %v2189 = vmax.f32 %v2173, 0.0
        %v2190 = vpack.c.bf16 %v2175, %v2174
        %v2191 = vpack.c.bf16 %v2177, %v2176
        %v2192 = vpack.c.bf16 %v2179, %v2178
        %v2193 = vpack.c.bf16 %v2181, %v2180
        %v2194 = vpack.c.bf16 %v2183, %v2182
        %v2195 = vpack.c.bf16 %v2185, %v2184
        %v2196 = vpack.c.bf16 %v2187, %v2186
        %v2197 = vpack.c.bf16 %v2189, %v2188
        %v2198 = vld [vmem:[%s11] sm:$0xf]
        %v2199 = vld [vmem:[%s11 + $0x4] sm:$0xf]
        %v2200 = vld [vmem:[%s11 + $0x8] sm:$0xf]
        %v2201 = vld [vmem:[%s11 + $0xc] sm:$0xf]
        %v2202 = vld [vmem:[%s11 + $0x10] sm:$0xf]
        %v2203 = vld [vmem:[%s11 + $0x14] sm:$0xf]
        %v2204 = vld [vmem:[%s11 + $0x18] sm:$0xf]
        %v2205 = vld [vmem:[%s11 + $0x1c] sm:$0xf]
        %v2206 = vld [vmem:[%s12] sm:$0x1]
        %v2208 = vlaneseq
        %v2209 = vshrl.u32 %v2208, 7
        %v2210 = vsub.s32 0, %v2209
        %v2211 = vrot.slane %v2206, %v2210
        %v2221 = vunpack.c.l.b16 %v2198
        %v2222 = vunpack.c.l.b16 %v2199
        %v2223 = vunpack.c.l.b16 %v2200
        %v2224 = vunpack.c.l.b16 %v2201
        %v2225 = vunpack.c.l.b16 %v2202
        %v2226 = vunpack.c.l.b16 %v2203
        %v2227 = vunpack.c.l.b16 %v2204
        %v2228 = vunpack.c.l.b16 %v2205
        %v2229 = vpack.c.b16 %v2222, %v2221
        %v2230 = vpack.c.b16 %v2224, %v2223
        %v2231 = vpack.c.b16 %v2226, %v2225
        %v2232 = vpack.c.b16 %v2228, %v2227
        %v2238 = vsel %vm1792, %v2190, 0
        %v2241 = vsel %vm1792, %v2191, 0
        %v2244 = vsel %vm1792, %v2192, 0
        %v2247 = vsel %vm1792, %v2193, 0
        %v2250 = vsel %vm1792, %v2194, 0
        %v2253 = vsel %vm1792, %v2195, 0
        %v2256 = vsel %vm1792, %v2196, 0
        %v2259 = vsel %vm1792, %v2197, 0
        %2261 = vmatprep.subr.bf16.mxu0 0
        %2262 = vmatpush1.bf16.msra.mxu0 0
        %2263 = vmatprep.subr.bf16.mxu0 0
        %2264 = vmatpush1.bf16.msra.mxu0 0
        %2265 = vmatprep.subr.bf16.mxu0 0
        %2266 = vmatpush1.bf16.msra.mxu0 0
        %2267 = vmatprep.subr.bf16.mxu0 0
        %2268 = vmatpush1.bf16.msra.mxu0 0
        %2269 = vmatprep.subr.bf16.mxu0 0
        %2270 = vmatpush1.bf16.msra.mxu0 %v2232
        %2271 = vmatprep.subr.bf16.mxu0 0
        %2272 = vmatpush1.bf16.msra.mxu0 %v2231
        %2273 = vmatprep.subr.bf16.mxu0 0
        %2274 = vmatpush1.bf16.msra.mxu0 %v2230
        %2275 = vmatprep.subr.bf16.mxu0 0
        %2276 = vmatpush1.bf16.msra.mxu0 %v2229
        %2277 = vmatprep.subr.bf16.mxu0 0
        %2278 = vmatpush2.bf16.msra.mxu0 0
        %2279 = vmatprep.subr.bf16.mxu0 0
        %2280 = vmatpush2.bf16.msra.mxu0 0
        %2281 = vmatprep.subr.bf16.mxu0 0
        %2282 = vmatpush2.bf16.msra.mxu0 0
        %2283 = vmatprep.subr.bf16.mxu0 0
        %2284 = vmatpush2.bf16.msra.mxu0 0
        %2285 = vmatprep.subr.bf16.mxu0 0
        %2286 = vmatpush2.bf16.msra.mxu0 0
        %2287 = vmatprep.subr.bf16.mxu0 0
        %2288 = vmatpush2.bf16.msra.mxu0 0
        %2289 = vmatprep.subr.bf16.mxu0 0
        %2290 = vmatpush2.bf16.msra.mxu0 0
        %2291 = vmatprep.subr.bf16.mxu0 0
        %2292 = vmatpush2.bf16.msra.mxu0 0
        %2293 = vmatprep.mubr.bf16.mxu0 0
        %2294 = vmatmul.mubr.bf16.gmra.mxu0 %v2238
        %v2295 = vpop.f32.mrf.mxu0
        %v2296 = vadd.f32 %v2211, %v2295
        %v2297 = vpop.f32.mrf.mxu0
        %v2298 = vpop.f32.mrf.mxu0
        %v2299 = vadd.f32 %v2211, %v2298
        %v2300 = vpop.f32.mrf.mxu0
        %2301 = vmatprep.mubr.bf16.mxu0 0
        %2302 = vmatmul.mubr.bf16.gmra.mxu0 %v2241
        %v2303 = vpop.f32.mrf.mxu0
        %v2304 = vadd.f32 %v2211, %v2303
        %v2305 = vpop.f32.mrf.mxu0
        %v2306 = vpop.f32.mrf.mxu0
        %v2307 = vadd.f32 %v2211, %v2306
        %v2308 = vpop.f32.mrf.mxu0
        %2309 = vmatprep.mubr.bf16.mxu0 0
        %2310 = vmatmul.mubr.bf16.gmra.mxu0 %v2244
        %v2311 = vpop.f32.mrf.mxu0
        %v2312 = vadd.f32 %v2211, %v2311
        %v2313 = vpop.f32.mrf.mxu0
        %v2314 = vpop.f32.mrf.mxu0
        %v2315 = vadd.f32 %v2211, %v2314
        %v2316 = vpop.f32.mrf.mxu0
        %2317 = vmatprep.mubr.bf16.mxu0 0
        %2318 = vmatmul.mubr.bf16.gmra.mxu0 %v2247
        %v2319 = vpop.f32.mrf.mxu0
        %v2320 = vadd.f32 %v2211, %v2319
        %v2321 = vpop.f32.mrf.mxu0
        %v2322 = vpop.f32.mrf.mxu0
        %v2323 = vadd.f32 %v2211, %v2322
        %v2324 = vpop.f32.mrf.mxu0
        %2325 = vmatprep.mubr.bf16.mxu0 0
        %2326 = vmatmul.mubr.bf16.gmra.mxu0 %v2250
        %v2327 = vpop.f32.mrf.mxu0
        %v2328 = vadd.f32 %v2211, %v2327
        %v2329 = vpop.f32.mrf.mxu0
        %v2330 = vpop.f32.mrf.mxu0
        %v2331 = vadd.f32 %v2211, %v2330
        %v2332 = vpop.f32.mrf.mxu0
        %2333 = vmatprep.mubr.bf16.mxu0 0
        %2334 = vmatmul.mubr.bf16.gmra.mxu0 %v2253
        %v2335 = vpop.f32.mrf.mxu0
        %v2336 = vadd.f32 %v2211, %v2335
        %v2337 = vpop.f32.mrf.mxu0
        %v2338 = vpop.f32.mrf.mxu0
        %v2339 = vadd.f32 %v2211, %v2338
        %v2340 = vpop.f32.mrf.mxu0
        %2341 = vmatprep.mubr.bf16.mxu0 0
        %2342 = vmatmul.mubr.bf16.gmra.mxu0 %v2256
        %v2343 = vpop.f32.mrf.mxu0
        %v2344 = vadd.f32 %v2211, %v2343
        %v2345 = vpop.f32.mrf.mxu0
        %v2346 = vpop.f32.mrf.mxu0
        %v2347 = vadd.f32 %v2211, %v2346
        %v2348 = vpop.f32.mrf.mxu0
        %2349 = vmatprep.mubr.bf16.mxu0 0
        %2350 = vmatmul.mubr.bf16.gmra.mxu0 %v2259
        %v2351 = vpop.f32.mrf.mxu0
        %v2352 = vadd.f32 %v2211, %v2351
        %v2353 = vpop.f32.mrf.mxu0
        %v2354 = vpop.f32.mrf.mxu0
        %v2355 = vadd.f32 %v2211, %v2354
        %v2356 = vpop.f32.mrf.mxu0
        %2357 = vdwg.mxu0
        %2358 = vst [vmem:[%s481] sm:$0xff] %v2296
        %2359 = vst [vmem:[%s481 + $0x8] sm:$0xff] %v2299
        %2360 = vst [vmem:[%s481 + $0x10] sm:$0xff] %v2304
        %2361 = vst [vmem:[%s481 + $0x18] sm:$0xff] %v2307
        %2362 = vst [vmem:[%s481 + $0x20] sm:$0xff] %v2312
        %2363 = vst [vmem:[%s481 + $0x28] sm:$0xff] %v2315
        %2364 = vst [vmem:[%s481 + $0x30] sm:$0xff] %v2320
        %2365 = vst [vmem:[%s481 + $0x38] sm:$0xff] %v2323
        %2366 = vst [vmem:[%s481 + $0x40] sm:$0xff] %v2328
        %2367 = vst [vmem:[%s481 + $0x48] sm:$0xff] %v2331
        %2368 = vst [vmem:[%s481 + $0x50] sm:$0xff] %v2336
        %2369 = vst [vmem:[%s481 + $0x58] sm:$0xff] %v2339
        %2370 = vst [vmem:[%s481 + $0x60] sm:$0xff] %v2344
        %2371 = vst [vmem:[%s481 + $0x68] sm:$0xff] %v2347
        %2372 = vst [vmem:[%s481 + $0x70] sm:$0xff] %v2352
        %2373 = vst [vmem:[%s481 + $0x78] sm:$0xff] %v2355
        %s2374 = sand.u32 %s317, 1
        %s2375 = scalar_lea.sflag [#allocation4], %s2374
        %s2376 = sand.u32 %s317, 1
        %s2377 = smul.addr %s2376, 128
        %s2378 = scalar_lea.vmem [#allocation7], %s2377
        // Predicated region
        $region81: #{model1_forward.1} parent=71 // pred_check
          %p2379 = pneg %p327
        $region82: #{model1_forward.1} parent=71 // pred_check_branch
          %2381 = sbr.rel (%p2379) target = $region84
        $region83: #{model1_forward.1} parent=71 // pred_region
          %s2382 = smul.u32 16, %s31
          %s2383 = ssub.s32 25, %s2382
          %p2384 = scmp.lt.s32.totalorder %s2383, 16
          %s2385 = scalar_select %p2384, %s2383, 16
          %s2386 = smul.u32 128, %s2385
          %s2388 = ssub.s32 2048, %s2386
          %2389 = vsyncadd %s2375, %s2388
          %p2390 = scmp.ne.s32.totalorder 0, %s2386
          %s2391 = smul.addr %s2382, 128
          %s2392 = scalar_lea.hbm %s13, %s2391
          %s2393 = smul.u32 8, %s2385
          %s2394 = sshll.u32 %s2378, 4
          %s2395 = int_to_ptr.vmem [resolvable:$true] %s2394
          %s2396 = sshll.u32 %s2393, 4
          %2400 = dma.vmem_to_hbm [thread:$0]  (%p2390), %s2395, %s2396, %s2392, %s2375, 128, 128, 8
        $region84: #{model1_forward.1} parent=71 // pred_fallthru
          _
      $region72: #{model1_forward.1} parent=5 // pred_fallthru
        _
      %p2401 = scmp.le.s32.totalorder 2, %s26
      // Predicated region
      $region85: #{model1_forward.1} parent=5 // pred_check
        %p2402 = pneg %p2401
      $region86: #{model1_forward.1} parent=5 // pred_check_branch
        %2404 = sbr.rel (%p2402) target = $region88
      $region87: #{model1_forward.1} parent=5 // pred_region
        %s2405 = ssub.s32 %s26, 2
        // Predicated region
        $region89: #{model1_forward.1} parent=87 // pred_check
          %p2406 = pneg %p333
        $region90: #{model1_forward.1} parent=87 // pred_check_branch
          %2408 = sbr.rel (%p2406) target = $region92
        $region91: #{model1_forward.1} parent=87 // pred_region
          %s2409 = sand.u32 %s318, 1
          %s2410 = scalar_lea.sflag [#allocation4], %s2409
          %s2411 = sand.u32 %s318, 1
          %s2412 = smul.addr %s2411, 128
          %s2413 = scalar_lea.vmem [#allocation7], %s2412
          %2414 = dma.done %s2410, 2048
        $region92: #{model1_forward.1} parent=87 // pred_fallthru
          _
      $region88: #{model1_forward.1} parent=5 // pred_fallthru
        _
    $region6: #{model1_forward.1} parent=1 // loop_footer
      %s30 = sadd.s32 1, %s26
    $region7: #{model1_forward.1} parent=1 // loop_footer_branch
      %25 = sbr.rel target = $region3
    $region8: #{model1_forward.1} parent=1 // loop_exit
      _
    %2415 = vsyncpa [#allocation3], 1
    %s2416 = scalar_lea.sflag [#allocation3], 1
    %2417 = vsyncpa %s2416, 1
    %2418 = vsyncpa [#allocation6], 1
    %2419 = vsyncpa [#allocation4], 1
    %s2420 = scalar_lea.sflag [#allocation4], 1
    %2421 = vsyncpa %s2420, 1

</llo_original>
